<compile_context>
chip_gen: v7x
topology: tpu7x:2x2x1
jax: 0.10.0
libtpu: 0.0.40
codegen_flags: <defaults>
</compile_context>

<pallas_src>
import jax
import jax.numpy as jnp
from jax.experimental import pallas as pl
from jax.experimental.pallas import tpu as pltpu

# ---------------------------------------------------------------------------
# Small example hyper-parameters, consistent with the module's constructor.
# ---------------------------------------------------------------------------
NUM_FEATURES = 16     # input_size of the RNN
HIDDEN_UNITS = 8      # hidden_size of the RNN
NUM_LAYERS = 2        # kernel is written for exactly 2 stacked RNN layers
OUT_DIMS = 6          # Linear out_features
BATCH = 2
SEQ = 8

_SELU_ALPHA = 1.6732632423543772
_SELU_SCALE = 1.0507009873554805


def _selu(v):
    return _SELU_SCALE * jnp.where(v > 0, v, _SELU_ALPHA * (jnp.exp(v) - 1.0))


def _rnn_kernel(x_ref, w0_ref, w1_ref, wl_ref, out_ref):
    """Single-invocation kernel (no grid).

    x_ref  : (B, S, F)   batch-first input, fully resident in VMEM
    w0_ref : (F+H+1, H)  packed [Wih0^T ; Whh0^T ; (b_ih0 + b_hh0)]
    w1_ref : (2H+1, H)   packed [Wih1^T ; Whh1^T ; (b_ih1 + b_hh1)]
    wl_ref : (H+1, O)    packed [Wlin^T ; b_lin]
    out_ref: (B, S, O)
    """
    B, S, F = x_ref.shape
    H = w1_ref.shape[1]
    O = wl_ref.shape[1]

    x = x_ref[...]                       # whole input slab (a few KB)

    wih0 = w0_ref[:F, :]                 # (F, H)
    whh0 = w0_ref[F:F + H, :]            # (H, H)
    b0 = w0_ref[F + H:, :]               # (1, H)
    wih1 = w1_ref[:H, :]                 # (H, H)
    whh1 = w1_ref[H:2 * H, :]            # (H, H)
    b1 = w1_ref[2 * H:, :]               # (1, H)
    wl = wl_ref[:H, :]                   # (H, O)
    bl = wl_ref[H:, :]                   # (1, O)

    # --- Layer-0 input projection hoisted out of the recurrence -------------
    # One (B*S, F) @ (F, H) matmul, bias b0 folded in exactly once.
    x_pre = (jnp.dot(x.reshape(B * S, F), wih0,
                     preferred_element_type=jnp.float32) + b0).reshape(B, S, H)

    # Hoisted bias broadcast (JAX does not CSE broadcast_in_dim in the
    # unrolled loop body).
    b1b = jnp.broadcast_to(b1, (B, H))

    h1 = jnp.zeros((B, H), jnp.float32)
    h2 = jnp.zeros((B, H), jnp.float32)
    h2_steps = []

    # S is a static Python int: this loop fully unrolls at trace time.
    # Per-step serial critical path: one (B,H)@(H,H) matmul + tanh per layer,
    # no lane-axis concatenates, no VMEM scratch stores.
    for t in range(S):
        h1 = jnp.tanh(x_pre[:, t, :]
                      + jnp.dot(h1, whh0, preferred_element_type=jnp.float32))
        h2 = jnp.tanh(jnp.dot(h1, wih1, preferred_element_type=jnp.float32)
                      + jnp.dot(h2, whh1, preferred_element_type=jnp.float32)
                      + b1b)
        h2_steps.append(h2)

    # Dropout (eval mode) == identity.  SELU + Linear collapsed into one
    # activation pass, one matmul, one full-slab store.
    h_all = jnp.stack(h2_steps, axis=1)                     # (B, S, H), in vregs
    s_all = _selu(h_all)
    y = jnp.dot(s_all.reshape(B * S, H), wl,
                preferred_element_type=jnp.float32) + bl    # (B*S, O)
    out_ref[...] = y.reshape(B, S, O).astype(out_ref.dtype)


@jax.jit
def causal_simple_rnn_forward(x, packed_params):
    """x: (B, S, F) batch_first, like the PyTorch module. Returns squeezed output."""
    w0p, w1p, wlp = packed_params
    B, S, _ = x.shape
    O = wlp.shape[1]

    vmem = pl.BlockSpec(memory_space=pltpu.MemorySpace.VMEM)
    out = pl.pallas_call(
        _rnn_kernel,
        out_shape=jax.ShapeDtypeStruct((B, S, O), x.dtype),
        in_specs=[vmem, vmem, vmem, vmem],
        out_specs=vmem,
    )(x, w0p, w1p, wlp)
    return jnp.squeeze(out)                                  # matches output.squeeze()


def init_params(key, num_features=NUM_FEATURES, hidden=HIDDEN_UNITS, out_dims=OUT_DIMS):
    """Raw parameters with exactly the nn.RNN / nn.Linear shapes.

    PyTorch shapes: weight_ih_l0 (H,F), weight_hh_l0 (H,H), biases (H,),
    weight_ih_l1 (H,H), weight_hh_l1 (H,H), linear.weight (O,H), linear.bias (O,).
    """
    ks = jax.random.split(key, 10)
    bound = 1.0 / (hidden ** 0.5)
    u = lambda k, shape: jax.random.uniform(k, shape, jnp.float32, -bound, bound)

    w_ih_l0 = u(ks[0], (hidden, num_features))
    w_hh_l0 = u(ks[1], (hidden, hidden))
    b_ih_l0 = u(ks[2], (hidden,))
    b_hh_l0 = u(ks[3], (hidden,))
    w_ih_l1 = u(ks[4], (hidden, hidden))
    w_hh_l1 = u(ks[5], (hidden, hidden))
    b_ih_l1 = u(ks[6], (hidden,))
    b_hh_l1 = u(ks[7], (hidden,))
    w_lin = u(ks[8], (out_dims, hidden))
    b_lin = u(ks[9], (out_dims,))
    return (w_ih_l0, w_hh_l0, b_ih_l0, b_hh_l0,
            w_ih_l1, w_hh_l1, b_ih_l1, b_hh_l1,
            w_lin, b_lin)


def pack_params(raw):
    """Pack the 10 PyTorch tensors into 3 kernel arrays (transposed weights,
    recurrent weight stacked under input weight, bias folded in as last row)."""
    (w_ih_l0, w_hh_l0, b_ih_l0, b_hh_l0,
     w_ih_l1, w_hh_l1, b_ih_l1, b_hh_l1,
     w_lin, b_lin) = raw
    w0p = jnp.concatenate([w_ih_l0.T, w_hh_l0.T, (b_ih_l0 + b_hh_l0)[None, :]], axis=0)
    w1p = jnp.concatenate([w_ih_l1.T, w_hh_l1.T, (b_ih_l1 + b_hh_l1)[None, :]], axis=0)
    wlp = jnp.concatenate([w_lin.T, b_lin[None, :]], axis=0)
    return (w0p, w1p, wlp)   # (F+H+1, H), (2H+1, H), (H+1, O)


def reference_forward(x, raw):
    """Pure-JAX reference mirroring the PyTorch forward (eval mode)."""
    (w_ih_l0, w_hh_l0, b_ih_l0, b_hh_l0,
     w_ih_l1, w_hh_l1, b_ih_l1, b_hh_l1,
     w_lin, b_lin) = raw
    B, S, _ = x.shape
    H = w_hh_l0.shape[0]
    h1 = jnp.zeros((B, H), jnp.float32)
    h2 = jnp.zeros((B, H), jnp.float32)
    outs = []
    for t in range(S):
        xt = x[:, t, :]
        h1 = jnp.tanh(xt @ w_ih_l0.T + b_ih_l0 + h1 @ w_hh_l0.T + b_hh_l0)
        h2 = jnp.tanh(h1 @ w_ih_l1.T + b_ih_l1 + h2 @ w_hh_l1.T + b_hh_l1)
        s = _selu(h2)
        outs.append(s @ w_lin.T + b_lin)
    return jnp.squeeze(jnp.stack(outs, axis=1))


if __name__ == "__main__":
    key = jax.random.PRNGKey(0)
    k_x, k_p = jax.random.split(key)

    x = jax.random.normal(k_x, (BATCH, SEQ, NUM_FEATURES), jnp.float32)
    raw = init_params(k_p)
    packed = pack_params(raw)

    out = causal_simple_rnn_forward(x, packed)
    out = jax.block_until_ready(out)

    ref = reference_forward(x, raw)
    assert out.shape == ref.shape, (out.shape, ref.shape)
    assert jnp.allclose(out, ref, atol=1e-5, rtol=1e-5), "mismatch vs reference"

    print("KERNEL_OK")
</pallas_src>

<mosaic_0001>
module attributes {stable_mosaic.version = 11 : i64} {
  func.func @_rnn_kernel(%arg0: memref<2x8x16xf32, #tpu.memory_space<vmem>>, %arg1: memref<25x8xf32, #tpu.memory_space<vmem>>, %arg2: memref<17x8xf32, #tpu.memory_space<vmem>>, %arg3: memref<9x6xf32, #tpu.memory_space<vmem>>, %arg4: memref<2x8x6xf32, #tpu.memory_space<vmem>>) attributes {dimension_semantics = [], scalar_prefetch = 0 : i64, scratch_operands = 0 : i64, tpu.core_type = #tpu.core_type<tc>} {
    %c0 = arith.constant 0 : index
    %c0_0 = arith.constant 0 : index
    %c0_1 = arith.constant 0 : index
    %0 = vector.load %arg0[%c0, %c0_0, %c0_1] : memref<2x8x16xf32, #tpu.memory_space<vmem>>, vector<2x8x16xf32>
    %c0_2 = arith.constant 0 : index
    %c0_3 = arith.constant 0 : index
    %1 = vector.load %arg1[%c0_2, %c0_3] : memref<25x8xf32, #tpu.memory_space<vmem>>, vector<16x8xf32>
    %c16 = arith.constant 16 : index
    %c0_4 = arith.constant 0 : index
    %2 = vector.load %arg1[%c16, %c0_4] : memref<25x8xf32, #tpu.memory_space<vmem>>, vector<8x8xf32>
    %c24 = arith.constant 24 : index
    %c0_5 = arith.constant 0 : index
    %3 = vector.load %arg1[%c24, %c0_5] : memref<25x8xf32, #tpu.memory_space<vmem>>, vector<1x8xf32>
    %c0_6 = arith.constant 0 : index
    %c0_7 = arith.constant 0 : index
    %4 = vector.load %arg2[%c0_6, %c0_7] : memref<17x8xf32, #tpu.memory_space<vmem>>, vector<8x8xf32>
    %c8 = arith.constant 8 : index
    %c0_8 = arith.constant 0 : index
    %5 = vector.load %arg2[%c8, %c0_8] : memref<17x8xf32, #tpu.memory_space<vmem>>, vector<8x8xf32>
    %c16_9 = arith.constant 16 : index
    %c0_10 = arith.constant 0 : index
    %6 = vector.load %arg2[%c16_9, %c0_10] : memref<17x8xf32, #tpu.memory_space<vmem>>, vector<1x8xf32>
    %c0_11 = arith.constant 0 : index
    %c0_12 = arith.constant 0 : index
    %7 = vector.load %arg3[%c0_11, %c0_12] : memref<9x6xf32, #tpu.memory_space<vmem>>, vector<8x6xf32>
    %c8_13 = arith.constant 8 : index
    %c0_14 = arith.constant 0 : index
    %8 = vector.load %arg3[%c8_13, %c0_14] : memref<9x6xf32, #tpu.memory_space<vmem>>, vector<1x6xf32>
    %9 = vector.shape_cast %0 : vector<2x8x16xf32> to vector<16x16xf32>
    %cst = arith.constant dense<0.000000e+00> : vector<16x8xf32>
    %10 = tpu.matmul %9, %1, %cst {dimension_numbers = #tpu.dot_dimension_numbers<[1], [0], [0], [1], [0, 0, 1, 1], [], []>} : vector<16x16xf32>, vector<16x8xf32>, vector<16x8xf32> -> vector<16x8xf32>
    %11 = vector.broadcast %3 : vector<1x8xf32> to vector<16x8xf32>
    %12 = arith.addf %10, %11 : vector<16x8xf32>
    %13 = vector.shape_cast %12 : vector<16x8xf32> to vector<2x8x8xf32>
    %14 = vector.shape_cast %6 : vector<1x8xf32> to vector<1x8xf32>
    %15 = vector.broadcast %14 : vector<1x8xf32> to vector<2x8xf32>
    %cst_15 = arith.constant 0.000000e+00 : f32
    %16 = vector.broadcast %cst_15 : f32 to vector<2x8xf32>
    %cst_16 = arith.constant 0.000000e+00 : f32
    %17 = vector.broadcast %cst_16 : f32 to vector<2x8xf32>
    %18 = vector.extract_strided_slice %13 {offsets = [0, 0, 0], sizes = [2, 1, 8], strides = [1, 1, 1]} : vector<2x8x8xf32> to vector<2x1x8xf32>
    %19 = vector.shape_cast %18 : vector<2x1x8xf32> to vector<2x8xf32>
    %cst_17 = arith.constant dense<0.000000e+00> : vector<2x8xf32>
    %20 = tpu.matmul %16, %2, %cst_17 {dimension_numbers = #tpu.dot_dimension_numbers<[1], [0], [0], [1], [0, 0, 1, 1], [], []>} : vector<2x8xf32>, vector<8x8xf32>, vector<2x8xf32> -> vector<2x8xf32>
    %21 = arith.addf %19, %20 : vector<2x8xf32>
    %22 = math.tanh %21 : vector<2x8xf32>
    %cst_18 = arith.constant dense<0.000000e+00> : vector<2x8xf32>
    %23 = tpu.matmul %22, %4, %cst_18 {dimension_numbers = #tpu.dot_dimension_numbers<[1], [0], [0], [1], [0, 0, 1, 1], [], []>} : vector<2x8xf32>, vector<8x8xf32>, vector<2x8xf32> -> vector<2x8xf32>
    %cst_19 = arith.constant dense<0.000000e+00> : vector<2x8xf32>
    %24 = tpu.matmul %17, %5, %cst_19 {dimension_numbers = #tpu.dot_dimension_numbers<[1], [0], [0], [1], [0, 0, 1, 1], [], []>} : vector<2x8xf32>, vector<8x8xf32>, vector<2x8xf32> -> vector<2x8xf32>
    %25 = arith.addf %23, %24 : vector<2x8xf32>
    %26 = arith.addf %25, %15 : vector<2x8xf32>
    %27 = math.tanh %26 : vector<2x8xf32>
    %28 = vector.extract_strided_slice %13 {offsets = [0, 1, 0], sizes = [2, 1, 8], strides = [1, 1, 1]} : vector<2x8x8xf32> to vector<2x1x8xf32>
    %29 = vector.shape_cast %28 : vector<2x1x8xf32> to vector<2x8xf32>
    %cst_20 = arith.constant dense<0.000000e+00> : vector<2x8xf32>
    %30 = tpu.matmul %22, %2, %cst_20 {dimension_numbers = #tpu.dot_dimension_numbers<[1], [0], [0], [1], [0, 0, 1, 1], [], []>} : vector<2x8xf32>, vector<8x8xf32>, vector<2x8xf32> -> vector<2x8xf32>
    %31 = arith.addf %29, %30 : vector<2x8xf32>
    %32 = math.tanh %31 : vector<2x8xf32>
    %cst_21 = arith.constant dense<0.000000e+00> : vector<2x8xf32>
    %33 = tpu.matmul %32, %4, %cst_21 {dimension_numbers = #tpu.dot_dimension_numbers<[1], [0], [0], [1], [0, 0, 1, 1], [], []>} : vector<2x8xf32>, vector<8x8xf32>, vector<2x8xf32> -> vector<2x8xf32>
    %cst_22 = arith.constant dense<0.000000e+00> : vector<2x8xf32>
    %34 = tpu.matmul %27, %5, %cst_22 {dimension_numbers = #tpu.dot_dimension_numbers<[1], [0], [0], [1], [0, 0, 1, 1], [], []>} : vector<2x8xf32>, vector<8x8xf32>, vector<2x8xf32> -> vector<2x8xf32>
    %35 = arith.addf %33, %34 : vector<2x8xf32>
    %36 = arith.addf %35, %15 : vector<2x8xf32>
    %37 = math.tanh %36 : vector<2x8xf32>
    %38 = vector.extract_strided_slice %13 {offsets = [0, 2, 0], sizes = [2, 1, 8], strides = [1, 1, 1]} : vector<2x8x8xf32> to vector<2x1x8xf32>
    %39 = vector.shape_cast %38 : vector<2x1x8xf32> to vector<2x8xf32>
    %cst_23 = arith.constant dense<0.000000e+00> : vector<2x8xf32>
    %40 = tpu.matmul %32, %2, %cst_23 {dimension_numbers = #tpu.dot_dimension_numbers<[1], [0], [0], [1], [0, 0, 1, 1], [], []>} : vector<2x8xf32>, vector<8x8xf32>, vector<2x8xf32> -> vector<2x8xf32>
    %41 = arith.addf %39, %40 : vector<2x8xf32>
    %42 = math.tanh %41 : vector<2x8xf32>
    %cst_24 = arith.constant dense<0.000000e+00> : vector<2x8xf32>
    %43 = tpu.matmul %42, %4, %cst_24 {dimension_numbers = #tpu.dot_dimension_numbers<[1], [0], [0], [1], [0, 0, 1, 1], [], []>} : vector<2x8xf32>, vector<8x8xf32>, vector<2x8xf32> -> vector<2x8xf32>
    %cst_25 = arith.constant dense<0.000000e+00> : vector<2x8xf32>
    %44 = tpu.matmul %37, %5, %cst_25 {dimension_numbers = #tpu.dot_dimension_numbers<[1], [0], [0], [1], [0, 0, 1, 1], [], []>} : vector<2x8xf32>, vector<8x8xf32>, vector<2x8xf32> -> vector<2x8xf32>
    %45 = arith.addf %43, %44 : vector<2x8xf32>
    %46 = arith.addf %45, %15 : vector<2x8xf32>
    %47 = math.tanh %46 : vector<2x8xf32>
    %48 = vector.extract_strided_slice %13 {offsets = [0, 3, 0], sizes = [2, 1, 8], strides = [1, 1, 1]} : vector<2x8x8xf32> to vector<2x1x8xf32>
    %49 = vector.shape_cast %48 : vector<2x1x8xf32> to vector<2x8xf32>
    %cst_26 = arith.constant dense<0.000000e+00> : vector<2x8xf32>
    %50 = tpu.matmul %42, %2, %cst_26 {dimension_numbers = #tpu.dot_dimension_numbers<[1], [0], [0], [1], [0, 0, 1, 1], [], []>} : vector<2x8xf32>, vector<8x8xf32>, vector<2x8xf32> -> vector<2x8xf32>
    %51 = arith.addf %49, %50 : vector<2x8xf32>
    %52 = math.tanh %51 : vector<2x8xf32>
    %cst_27 = arith.constant dense<0.000000e+00> : vector<2x8xf32>
    %53 = tpu.matmul %52, %4, %cst_27 {dimension_numbers = #tpu.dot_dimension_numbers<[1], [0], [0], [1], [0, 0, 1, 1], [], []>} : vector<2x8xf32>, vector<8x8xf32>, vector<2x8xf32> -> vector<2x8xf32>
    %cst_28 = arith.constant dense<0.000000e+00> : vector<2x8xf32>
    %54 = tpu.matmul %47, %5, %cst_28 {dimension_numbers = #tpu.dot_dimension_numbers<[1], [0], [0], [1], [0, 0, 1, 1], [], []>} : vector<2x8xf32>, vector<8x8xf32>, vector<2x8xf32> -> vector<2x8xf32>
    %55 = arith.addf %53, %54 : vector<2x8xf32>
    %56 = arith.addf %55, %15 : vector<2x8xf32>
    %57 = math.tanh %56 : vector<2x8xf32>
    %58 = vector.extract_strided_slice %13 {offsets = [0, 4, 0], sizes = [2, 1, 8], strides = [1, 1, 1]} : vector<2x8x8xf32> to vector<2x1x8xf32>
    %59 = vector.shape_cast %58 : vector<2x1x8xf32> to vector<2x8xf32>
    %cst_29 = arith.constant dense<0.000000e+00> : vector<2x8xf32>
    %60 = tpu.matmul %52, %2, %cst_29 {dimension_numbers = #tpu.dot_dimension_numbers<[1], [0], [0], [1], [0, 0, 1, 1], [], []>} : vector<2x8xf32>, vector<8x8xf32>, vector<2x8xf32> -> vector<2x8xf32>
    %61 = arith.addf %59, %60 : vector<2x8xf32>
    %62 = math.tanh %61 : vector<2x8xf32>
    %cst_30 = arith.constant dense<0.000000e+00> : vector<2x8xf32>
    %63 = tpu.matmul %62, %4, %cst_30 {dimension_numbers = #tpu.dot_dimension_numbers<[1], [0], [0], [1], [0, 0, 1, 1], [], []>} : vector<2x8xf32>, vector<8x8xf32>, vector<2x8xf32> -> vector<2x8xf32>
    %cst_31 = arith.constant dense<0.000000e+00> : vector<2x8xf32>
    %64 = tpu.matmul %57, %5, %cst_31 {dimension_numbers = #tpu.dot_dimension_numbers<[1], [0], [0], [1], [0, 0, 1, 1], [], []>} : vector<2x8xf32>, vector<8x8xf32>, vector<2x8xf32> -> vector<2x8xf32>
    %65 = arith.addf %63, %64 : vector<2x8xf32>
    %66 = arith.addf %65, %15 : vector<2x8xf32>
    %67 = math.tanh %66 : vector<2x8xf32>
    %68 = vector.extract_strided_slice %13 {offsets = [0, 5, 0], sizes = [2, 1, 8], strides = [1, 1, 1]} : vector<2x8x8xf32> to vector<2x1x8xf32>
    %69 = vector.shape_cast %68 : vector<2x1x8xf32> to vector<2x8xf32>
    %cst_32 = arith.constant dense<0.000000e+00> : vector<2x8xf32>
    %70 = tpu.matmul %62, %2, %cst_32 {dimension_numbers = #tpu.dot_dimension_numbers<[1], [0], [0], [1], [0, 0, 1, 1], [], []>} : vector<2x8xf32>, vector<8x8xf32>, vector<2x8xf32> -> vector<2x8xf32>
    %71 = arith.addf %69, %70 : vector<2x8xf32>
    %72 = math.tanh %71 : vector<2x8xf32>
    %cst_33 = arith.constant dense<0.000000e+00> : vector<2x8xf32>
    %73 = tpu.matmul %72, %4, %cst_33 {dimension_numbers = #tpu.dot_dimension_numbers<[1], [0], [0], [1], [0, 0, 1, 1], [], []>} : vector<2x8xf32>, vector<8x8xf32>, vector<2x8xf32> -> vector<2x8xf32>
    %cst_34 = arith.constant dense<0.000000e+00> : vector<2x8xf32>
    %74 = tpu.matmul %67, %5, %cst_34 {dimension_numbers = #tpu.dot_dimension_numbers<[1], [0], [0], [1], [0, 0, 1, 1], [], []>} : vector<2x8xf32>, vector<8x8xf32>, vector<2x8xf32> -> vector<2x8xf32>
    %75 = arith.addf %73, %74 : vector<2x8xf32>
    %76 = arith.addf %75, %15 : vector<2x8xf32>
    %77 = math.tanh %76 : vector<2x8xf32>
    %78 = vector.extract_strided_slice %13 {offsets = [0, 6, 0], sizes = [2, 1, 8], strides = [1, 1, 1]} : vector<2x8x8xf32> to vector<2x1x8xf32>
    %79 = vector.shape_cast %78 : vector<2x1x8xf32> to vector<2x8xf32>
    %cst_35 = arith.constant dense<0.000000e+00> : vector<2x8xf32>
    %80 = tpu.matmul %72, %2, %cst_35 {dimension_numbers = #tpu.dot_dimension_numbers<[1], [0], [0], [1], [0, 0, 1, 1], [], []>} : vector<2x8xf32>, vector<8x8xf32>, vector<2x8xf32> -> vector<2x8xf32>
    %81 = arith.addf %79, %80 : vector<2x8xf32>
    %82 = math.tanh %81 : vector<2x8xf32>
    %cst_36 = arith.constant dense<0.000000e+00> : vector<2x8xf32>
    %83 = tpu.matmul %82, %4, %cst_36 {dimension_numbers = #tpu.dot_dimension_numbers<[1], [0], [0], [1], [0, 0, 1, 1], [], []>} : vector<2x8xf32>, vector<8x8xf32>, vector<2x8xf32> -> vector<2x8xf32>
    %cst_37 = arith.constant dense<0.000000e+00> : vector<2x8xf32>
    %84 = tpu.matmul %77, %5, %cst_37 {dimension_numbers = #tpu.dot_dimension_numbers<[1], [0], [0], [1], [0, 0, 1, 1], [], []>} : vector<2x8xf32>, vector<8x8xf32>, vector<2x8xf32> -> vector<2x8xf32>
    %85 = arith.addf %83, %84 : vector<2x8xf32>
    %86 = arith.addf %85, %15 : vector<2x8xf32>
    %87 = math.tanh %86 : vector<2x8xf32>
    %88 = vector.extract_strided_slice %13 {offsets = [0, 7, 0], sizes = [2, 1, 8], strides = [1, 1, 1]} : vector<2x8x8xf32> to vector<2x1x8xf32>
    %89 = vector.shape_cast %88 : vector<2x1x8xf32> to vector<2x8xf32>
    %cst_38 = arith.constant dense<0.000000e+00> : vector<2x8xf32>
    %90 = tpu.matmul %82, %2, %cst_38 {dimension_numbers = #tpu.dot_dimension_numbers<[1], [0], [0], [1], [0, 0, 1, 1], [], []>} : vector<2x8xf32>, vector<8x8xf32>, vector<2x8xf32> -> vector<2x8xf32>
    %91 = arith.addf %89, %90 : vector<2x8xf32>
    %92 = math.tanh %91 : vector<2x8xf32>
    %cst_39 = arith.constant dense<0.000000e+00> : vector<2x8xf32>
    %93 = tpu.matmul %92, %4, %cst_39 {dimension_numbers = #tpu.dot_dimension_numbers<[1], [0], [0], [1], [0, 0, 1, 1], [], []>} : vector<2x8xf32>, vector<8x8xf32>, vector<2x8xf32> -> vector<2x8xf32>
    %cst_40 = arith.constant dense<0.000000e+00> : vector<2x8xf32>
    %94 = tpu.matmul %87, %5, %cst_40 {dimension_numbers = #tpu.dot_dimension_numbers<[1], [0], [0], [1], [0, 0, 1, 1], [], []>} : vector<2x8xf32>, vector<8x8xf32>, vector<2x8xf32> -> vector<2x8xf32>
    %95 = arith.addf %93, %94 : vector<2x8xf32>
    %96 = arith.addf %95, %15 : vector<2x8xf32>
    %97 = math.tanh %96 : vector<2x8xf32>
    %98 = vector.shape_cast %27 : vector<2x8xf32> to vector<2x1x8xf32>
    %99 = vector.shape_cast %37 : vector<2x8xf32> to vector<2x1x8xf32>
    %100 = vector.shape_cast %47 : vector<2x8xf32> to vector<2x1x8xf32>
    %101 = vector.shape_cast %57 : vector<2x8xf32> to vector<2x1x8xf32>
    %102 = vector.shape_cast %67 : vector<2x8xf32> to vector<2x1x8xf32>
    %103 = vector.shape_cast %77 : vector<2x8xf32> to vector<2x1x8xf32>
    %104 = vector.shape_cast %87 : vector<2x8xf32> to vector<2x1x8xf32>
    %105 = vector.shape_cast %97 : vector<2x8xf32> to vector<2x1x8xf32>
    %106 = tpu.concatenate %98, %99, %100, %101, %102, %103, %104, %105 in 1 : vector<2x1x8xf32>, vector<2x1x8xf32>, vector<2x1x8xf32>, vector<2x1x8xf32>, vector<2x1x8xf32>, vector<2x1x8xf32>, vector<2x1x8xf32>, vector<2x1x8xf32> -> vector<2x8x8xf32>
    %cst_41 = arith.constant 0.000000e+00 : f32
    %107 = vector.broadcast %cst_41 : f32 to vector<2x8x8xf32>
    %108 = arith.cmpf ogt, %106, %107 : vector<2x8x8xf32>
    %109 = math.exp %106 : vector<2x8x8xf32>
    %cst_42 = arith.constant 1.000000e+00 : f32
    %110 = vector.broadcast %cst_42 : f32 to vector<2x8x8xf32>
    %111 = arith.subf %109, %110 : vector<2x8x8xf32>
    %cst_43 = arith.constant 1.67326319 : f32
    %112 = vector.broadcast %cst_43 : f32 to vector<2x8x8xf32>
    %113 = arith.mulf %112, %111 : vector<2x8x8xf32>
    %114 = arith.select %108, %106, %113 : vector<2x8x8xi1>, vector<2x8x8xf32>
    %cst_44 = arith.constant 1.05070102 : f32
    %115 = vector.broadcast %cst_44 : f32 to vector<2x8x8xf32>
    %116 = arith.mulf %115, %114 : vector<2x8x8xf32>
    %117 = vector.shape_cast %116 : vector<2x8x8xf32> to vector<16x8xf32>
    %cst_45 = arith.constant dense<0.000000e+00> : vector<16x6xf32>
    %118 = tpu.matmul %117, %7, %cst_45 {dimension_numbers = #tpu.dot_dimension_numbers<[1], [0], [0], [1], [0, 0, 1, 1], [], []>} : vector<16x8xf32>, vector<8x6xf32>, vector<16x6xf32> -> vector<16x6xf32>
    %119 = vector.broadcast %8 : vector<1x6xf32> to vector<16x6xf32>
    %120 = arith.addf %118, %119 : vector<16x6xf32>
    %121 = vector.shape_cast %120 : vector<16x6xf32> to vector<2x8x6xf32>
    %c0_46 = arith.constant 0 : index
    %c0_47 = arith.constant 0 : index
    %c0_48 = arith.constant 0 : index
    %122 = vector.load %arg4[%c0_46, %c0_47, %c0_48] : memref<2x8x6xf32, #tpu.memory_space<vmem>>, vector<2x8x6xf32>
    tpu.vector_store %arg4[%c0_46, %c0_47, %c0_48], %121 {strides = array<i32>} : memref<2x8x6xf32, #tpu.memory_space<vmem>>, vector<2x8x6xf32>,
    return
  }
}

</mosaic_0001>

<llo_original>
// kernel: causal_simple_rnn_forward.1
$region0: #{causal_simple_rnn_forward.1}
  #allocation0 [shape = 'u32[]', space=smem, size = 0x4, offset = 0x4, fixed_abs, tag = 'smem constant byte address 0x4 - core index']
  #allocation1 [shape = 'u32[144,128]{1,0:T(1,128)}', space=vmem, size = 0x12000, scoped, tag = 'internal scratch']
  %s0 = inlined_call_operand.vmem [shape: f32[2,8,16], index: 0, kind: input, shape index: {}]
  %s1 = inlined_call_operand.vmem [shape: f32[25,8], index: 1, kind: input, shape index: {}]
  %s2 = inlined_call_operand.vmem [shape: f32[17,8], index: 2, kind: input, shape index: {}]
  %s3 = inlined_call_operand.vmem [shape: f32[9,6], index: 3, kind: input, shape index: {}]
  %s4 = inlined_call_operand.vmem [shape: f32[2,8,6], index: 4, kind: output, shape index: {}]
  %s5 = sld [smem:[#allocation0]]
  $region26: #{causal_simple_rnn_forward.1} parent=0
    _
  %s7 = ssub.s32 1, %s5
  %s8 = scalar_select 0, %s7, %s5
  // Predicated region
  $region2: #{causal_simple_rnn_forward.1} parent=0 // pred_check
    _
  $region3: #{causal_simple_rnn_forward.1} parent=0 // pred_check_branch
    %10 = sbr.rel (0) target = $region5
  $region4: #{causal_simple_rnn_forward.1} parent=0 // pred_region
    _
  $region5: #{causal_simple_rnn_forward.1} parent=0 // pred_fallthru
    _
  // Predicated region
  $region6: #{causal_simple_rnn_forward.1} parent=0 // pred_check
    _
  $region7: #{causal_simple_rnn_forward.1} parent=0 // pred_check_branch
    %12 = sbr.rel (0) target = $region9
  $region8: #{causal_simple_rnn_forward.1} parent=0 // pred_region
    _
  $region9: #{causal_simple_rnn_forward.1} parent=0 // pred_fallthru
    _
  // Predicated region
  $region10: #{causal_simple_rnn_forward.1} parent=0 // pred_check
    _
  $region11: #{causal_simple_rnn_forward.1} parent=0 // pred_check_branch
    %14 = sbr.rel (0) target = $region13
  $region12: #{causal_simple_rnn_forward.1} parent=0 // pred_region
    _
  $region13: #{causal_simple_rnn_forward.1} parent=0 // pred_fallthru
    _
  // Predicated region
  $region14: #{causal_simple_rnn_forward.1} parent=0 // pred_check
    _
  $region15: #{causal_simple_rnn_forward.1} parent=0 // pred_check_branch
    %16 = sbr.rel (0) target = $region17
  $region16: #{causal_simple_rnn_forward.1} parent=0 // pred_region
    _
  $region17: #{causal_simple_rnn_forward.1} parent=0 // pred_fallthru
    _
  %v17 = vld [vmem:[%s0] sm:$0xff]
  %v18 = vld [vmem:[%s0 + $0x8] sm:$0xff]
  %v19 = vld [vmem:[%s1] sm:$0xff]
  %v20 = vld [vmem:[%s1 + $0x8] sm:$0xff]
  %v21 = vld [vmem:[%s1 + $0x10] sm:$0xff]
  %v22 = vld [vmem:[%s1 + $0x18] sm:$0x1]
  %v23 = vld [vmem:[%s2] sm:$0xff]
  %v24 = vld [vmem:[%s2 + $0x8] sm:$0xff]
  %v25 = vld [vmem:[%s2 + $0x10] sm:$0x1]
  %v26 = vld [vmem:[%s3] sm:$0xff]
  %v27 = vld [vmem:[%s3 + $0x8] sm:$0x1]
  %v28 = vlaneseq
  %v29 = vshrl.u32 %v28, 7
  %v30 = vsub.s32 0, %v29
  %v31 = vrot.slane %v22, %v30
  %vm32 = vcmask 130048
  %v34 = vsel %vm32, %v17, 0
  %v37 = vsel %vm32, %v18, 0
  %39 = vmatprep.subr.mxu0 0.0
  %40 = vmatpush1.msra.mxu0 %v19
  %41 = vmatprep.subr.mxu0 0.0
  %42 = vmatpush1.msra.mxu0 %v20
  %43 = vmatprep.subr.mxu0 0.0
  %44 = vmatpush1.msra.mxu0 0.0
  %45 = vmatprep.subr.mxu0 0.0
  %46 = vmatpush1.msra.mxu0 0.0
  %47 = vmatprep.subr.mxu0 0.0
  %48 = vmatpush1.msra.mxu0 0.0
  %49 = vmatprep.subr.mxu0 0.0
  %50 = vmatpush1.msra.mxu0 0.0
  %51 = vmatprep.subr.mxu0 0.0
  %52 = vmatpush1.msra.mxu0 0.0
  %53 = vmatprep.subr.mxu0 0.0
  %54 = vmatpush1.msra.mxu0 0.0
  %55 = vmatprep.subr.mxu0 0.0
  %56 = vmatpush1.msra.mxu0 0.0
  %57 = vmatprep.subr.mxu0 0.0
  %58 = vmatpush1.msra.mxu0 0.0
  %59 = vmatprep.subr.mxu0 0.0
  %60 = vmatpush1.msra.mxu0 0.0
  %61 = vmatprep.subr.mxu0 0.0
  %62 = vmatpush1.msra.mxu0 0.0
  %63 = vmatprep.subr.mxu0 0.0
  %64 = vmatpush1.msra.mxu0 0.0
  %65 = vmatprep.subr.mxu0 0.0
  %66 = vmatpush1.msra.mxu0 0.0
  %67 = vmatprep.subr.mxu0 0.0
  %68 = vmatpush1.msra.mxu0 0.0
  %69 = vmatprep.subr.mxu0 0.0
  %70 = vmatpush1.msra.mxu0 0.0
  %71 = vmatprep.subr.mxu0 0.0
  %72 = vmatpush1.msra.mxu0 0.0
  %73 = vmatprep.subr.mxu0 0.0
  %74 = vmatpush1.msra.mxu0 0.0
  %75 = vmatprep.subr.mxu0 0.0
  %76 = vmatpush1.msra.mxu0 0.0
  %77 = vmatprep.subr.mxu0 0.0
  %78 = vmatpush1.msra.mxu0 0.0
  %79 = vmatprep.subr.mxu0 0.0
  %80 = vmatpush1.msra.mxu0 0.0
  %81 = vmatprep.subr.mxu0 0.0
  %82 = vmatpush1.msra.mxu0 0.0
  %83 = vmatprep.subr.mxu0 0.0
  %84 = vmatpush1.msra.mxu0 0.0
  %85 = vmatprep.subr.mxu0 0.0
  %86 = vmatpush1.msra.mxu0 0.0
  %87 = vmatprep.subr.mxu0 0.0
  %88 = vmatpush1.msra.mxu0 0.0
  %89 = vmatprep.subr.mxu0 0.0
  %90 = vmatpush1.msra.mxu0 0.0
  %91 = vmatprep.subr.mxu0 0.0
  %92 = vmatpush1.msra.mxu0 0.0
  %93 = vmatprep.subr.mxu0 0.0
  %94 = vmatpush1.msra.mxu0 0.0
  %95 = vmatprep.subr.mxu0 0.0
  %96 = vmatpush1.msra.mxu0 0.0
  %97 = vmatprep.subr.mxu0 0.0
  %98 = vmatpush1.msra.mxu0 0.0
  %99 = vmatprep.subr.mxu0 0.0
  %100 = vmatpush1.msra.mxu0 0.0
  %101 = vmatprep.subr.mxu0 0.0
  %102 = vmatpush1.msra.mxu0 0.0
  %103 = vmatprep.mubr.f32.mxu0 0.0
  %104 = vmatmul.mubr.f32.gmra.mrb[0].mxu0 %v34
  %v105 = vpop.f32.mrb[0].mxu0
  %v106 = vadd.f32 %v31, %v105
  %v107 = vpop.f32.mrb[0].mxu0
  %108 = vmatprep.mubr.f32.mxu0 0.0
  %109 = vmatmul.mubr.f32.gmra.mrb[0].mxu0 %v37
  %v110 = vpop.f32.mrb[0].mxu0
  %v111 = vadd.f32 %v31, %v110
  %v112 = vpop.f32.mrb[0].mxu0
  %113 = vdwg.mxu0
  %v114 = vlaneseq
  %v115 = vshrl.u32 %v114, 7
  %v116 = vsub.s32 0, %v115
  %v117 = vrot.slane %v25, %v116
  %vm118 = vcmask 64512
  %v120 = vsel %vm118, 0.0, 0
  %122 = vmatprep.subr.mxu0 0.0
  %123 = vmatpush1.msra.mxu0 %v21
  %124 = vmatprep.subr.mxu0 0.0
  %125 = vmatpush1.msra.mxu0 0.0
  %126 = vmatprep.subr.mxu0 0.0
  %127 = vmatpush1.msra.mxu0 0.0
  %128 = vmatprep.subr.mxu0 0.0
  %129 = vmatpush1.msra.mxu0 0.0
  %130 = vmatprep.subr.mxu0 0.0
  %131 = vmatpush1.msra.mxu0 0.0
  %132 = vmatprep.subr.mxu0 0.0
  %133 = vmatpush1.msra.mxu0 0.0
  %134 = vmatprep.subr.mxu0 0.0
  %135 = vmatpush1.msra.mxu0 0.0
  %136 = vmatprep.subr.mxu0 0.0
  %137 = vmatpush1.msra.mxu0 0.0
  %138 = vmatprep.subr.mxu0 0.0
  %139 = vmatpush1.msra.mxu0 0.0
  %140 = vmatprep.subr.mxu0 0.0
  %141 = vmatpush1.msra.mxu0 0.0
  %142 = vmatprep.subr.mxu0 0.0
  %143 = vmatpush1.msra.mxu0 0.0
  %144 = vmatprep.subr.mxu0 0.0
  %145 = vmatpush1.msra.mxu0 0.0
  %146 = vmatprep.subr.mxu0 0.0
  %147 = vmatpush1.msra.mxu0 0.0
  %148 = vmatprep.subr.mxu0 0.0
  %149 = vmatpush1.msra.mxu0 0.0
  %150 = vmatprep.subr.mxu0 0.0
  %151 = vmatpush1.msra.mxu0 0.0
  %152 = vmatprep.subr.mxu0 0.0
  %153 = vmatpush1.msra.mxu0 0.0
  %154 = vmatprep.subr.mxu0 0.0
  %155 = vmatpush1.msra.mxu0 0.0
  %156 = vmatprep.subr.mxu0 0.0
  %157 = vmatpush1.msra.mxu0 0.0
  %158 = vmatprep.subr.mxu0 0.0
  %159 = vmatpush1.msra.mxu0 0.0
  %160 = vmatprep.subr.mxu0 0.0
  %161 = vmatpush1.msra.mxu0 0.0
  %162 = vmatprep.subr.mxu0 0.0
  %163 = vmatpush1.msra.mxu0 0.0
  %164 = vmatprep.subr.mxu0 0.0
  %165 = vmatpush1.msra.mxu0 0.0
  %166 = vmatprep.subr.mxu0 0.0
  %167 = vmatpush1.msra.mxu0 0.0
  %168 = vmatprep.subr.mxu0 0.0
  %169 = vmatpush1.msra.mxu0 0.0
  %170 = vmatprep.subr.mxu0 0.0
  %171 = vmatpush1.msra.mxu0 0.0
  %172 = vmatprep.subr.mxu0 0.0
  %173 = vmatpush1.msra.mxu0 0.0
  %174 = vmatprep.subr.mxu0 0.0
  %175 = vmatpush1.msra.mxu0 0.0
  %176 = vmatprep.subr.mxu0 0.0
  %177 = vmatpush1.msra.mxu0 0.0
  %178 = vmatprep.subr.mxu0 0.0
  %179 = vmatpush1.msra.mxu0 0.0
  %180 = vmatprep.subr.mxu0 0.0
  %181 = vmatpush1.msra.mxu0 0.0
  %182 = vmatprep.subr.mxu0 0.0
  %183 = vmatpush1.msra.mxu0 0.0
  %184 = vmatprep.subr.mxu0 0.0
  %185 = vmatpush1.msra.mxu0 0.0
  %186 = vmatprep.mubr.f32.mxu0 0.0
  %187 = vmatmul.mubr.f32.gmra.mrb[0].mxu0 %v120
  %v188 = vpop.f32.mrb[0].mxu0
  %v189 = vadd.f32 0.0, %v188
  %v190 = vpop.f32.mrb[0].mxu0
  %191 = vdwg.mxu0
  %v193 = vrot.slane %v189, 1
  %v196 = vadd.f32 %v106, %v189
  %v197 = vadd.f32 %v111, %v193
  %v198 = vtanh.pop %v196
  %v199 = vtanh.pop %v197
  %200 = vmatprep.subr.mxu0 0.0
  %201 = vmatpush1.msra.mxu0 %v24
  %202 = vmatprep.subr.mxu0 0.0
  %203 = vmatpush1.msra.mxu0 0.0
  %204 = vmatprep.subr.mxu0 0.0
  %205 = vmatpush1.msra.mxu0 0.0
  %206 = vmatprep.subr.mxu0 0.0
  %207 = vmatpush1.msra.mxu0 0.0
  %208 = vmatprep.subr.mxu0 0.0
  %209 = vmatpush1.msra.mxu0 0.0
  %210 = vmatprep.subr.mxu0 0.0
  %211 = vmatpush1.msra.mxu0 0.0
  %212 = vmatprep.subr.mxu0 0.0
  %213 = vmatpush1.msra.mxu0 0.0
  %214 = vmatprep.subr.mxu0 0.0
  %215 = vmatpush1.msra.mxu0 0.0
  %216 = vmatprep.subr.mxu0 0.0
  %217 = vmatpush1.msra.mxu0 0.0
  %218 = vmatprep.subr.mxu0 0.0
  %219 = vmatpush1.msra.mxu0 0.0
  %220 = vmatprep.subr.mxu0 0.0
  %221 = vmatpush1.msra.mxu0 0.0
  %222 = vmatprep.subr.mxu0 0.0
  %223 = vmatpush1.msra.mxu0 0.0
  %224 = vmatprep.subr.mxu0 0.0
  %225 = vmatpush1.msra.mxu0 0.0
  %226 = vmatprep.subr.mxu0 0.0
  %227 = vmatpush1.msra.mxu0 0.0
  %228 = vmatprep.subr.mxu0 0.0
  %229 = vmatpush1.msra.mxu0 0.0
  %230 = vmatprep.subr.mxu0 0.0
  %231 = vmatpush1.msra.mxu0 0.0
  %232 = vmatprep.subr.mxu0 0.0
  %233 = vmatpush1.msra.mxu0 0.0
  %234 = vmatprep.subr.mxu0 0.0
  %235 = vmatpush1.msra.mxu0 0.0
  %236 = vmatprep.subr.mxu0 0.0
  %237 = vmatpush1.msra.mxu0 0.0
  %238 = vmatprep.subr.mxu0 0.0
  %239 = vmatpush1.msra.mxu0 0.0
  %240 = vmatprep.subr.mxu0 0.0
  %241 = vmatpush1.msra.mxu0 0.0
  %242 = vmatprep.subr.mxu0 0.0
  %243 = vmatpush1.msra.mxu0 0.0
  %244 = vmatprep.subr.mxu0 0.0
  %245 = vmatpush1.msra.mxu0 0.0
  %246 = vmatprep.subr.mxu0 0.0
  %247 = vmatpush1.msra.mxu0 0.0
  %248 = vmatprep.subr.mxu0 0.0
  %249 = vmatpush1.msra.mxu0 0.0
  %250 = vmatprep.subr.mxu0 0.0
  %251 = vmatpush1.msra.mxu0 0.0
  %252 = vmatprep.subr.mxu0 0.0
  %253 = vmatpush1.msra.mxu0 0.0
  %254 = vmatprep.subr.mxu0 0.0
  %255 = vmatpush1.msra.mxu0 0.0
  %256 = vmatprep.subr.mxu0 0.0
  %257 = vmatpush1.msra.mxu0 0.0
  %258 = vmatprep.subr.mxu0 0.0
  %259 = vmatpush1.msra.mxu0 0.0
  %260 = vmatprep.subr.mxu0 0.0
  %261 = vmatpush1.msra.mxu0 0.0
  %262 = vmatprep.subr.mxu0 0.0
  %263 = vmatpush1.msra.mxu0 0.0
  %264 = vmatprep.mubr.f32.mxu0 0.0
  %265 = vmatmul.mubr.f32.gmra.mrb[0].mxu0 %v120
  %v266 = vpop.f32.mrb[0].mxu0
  %v267 = vadd.f32 0.0, %v266
  %v268 = vpop.f32.mrb[0].mxu0
  %269 = vdwg.mxu0
  %v272 = vrot.slane %v199, 7
  %vm273 = vcmask 1041409
  %v274 = vsel %vm273, %v272, %v198
  %v275 = vsel %vm118, %v274, 0
  %277 = vmatprep.subr.mxu0 0.0
  %278 = vmatpush1.msra.mxu0 %v23
  %279 = vmatprep.subr.mxu0 0.0
  %280 = vmatpush1.msra.mxu0 0.0
  %281 = vmatprep.subr.mxu0 0.0
  %282 = vmatpush1.msra.mxu0 0.0
  %283 = vmatprep.subr.mxu0 0.0
  %284 = vmatpush1.msra.mxu0 0.0
  %285 = vmatprep.subr.mxu0 0.0
  %286 = vmatpush1.msra.mxu0 0.0
  %287 = vmatprep.subr.mxu0 0.0
  %288 = vmatpush1.msra.mxu0 0.0
  %289 = vmatprep.subr.mxu0 0.0
  %290 = vmatpush1.msra.mxu0 0.0
  %291 = vmatprep.subr.mxu0 0.0
  %292 = vmatpush1.msra.mxu0 0.0
  %293 = vmatprep.subr.mxu0 0.0
  %294 = vmatpush1.msra.mxu0 0.0
  %295 = vmatprep.subr.mxu0 0.0
  %296 = vmatpush1.msra.mxu0 0.0
  %297 = vmatprep.subr.mxu0 0.0
  %298 = vmatpush1.msra.mxu0 0.0
  %299 = vmatprep.subr.mxu0 0.0
  %300 = vmatpush1.msra.mxu0 0.0
  %301 = vmatprep.subr.mxu0 0.0
  %302 = vmatpush1.msra.mxu0 0.0
  %303 = vmatprep.subr.mxu0 0.0
  %304 = vmatpush1.msra.mxu0 0.0
  %305 = vmatprep.subr.mxu0 0.0
  %306 = vmatpush1.msra.mxu0 0.0
  %307 = vmatprep.subr.mxu0 0.0
  %308 = vmatpush1.msra.mxu0 0.0
  %309 = vmatprep.subr.mxu0 0.0
  %310 = vmatpush1.msra.mxu0 0.0
  %311 = vmatprep.subr.mxu0 0.0
  %312 = vmatpush1.msra.mxu0 0.0
  %313 = vmatprep.subr.mxu0 0.0
  %314 = vmatpush1.msra.mxu0 0.0
  %315 = vmatprep.subr.mxu0 0.0
  %316 = vmatpush1.msra.mxu0 0.0
  %317 = vmatprep.subr.mxu0 0.0
  %318 = vmatpush1.msra.mxu0 0.0
  %319 = vmatprep.subr.mxu0 0.0
  %320 = vmatpush1.msra.mxu0 0.0
  %321 = vmatprep.subr.mxu0 0.0
  %322 = vmatpush1.msra.mxu0 0.0
  %323 = vmatprep.subr.mxu0 0.0
  %324 = vmatpush1.msra.mxu0 0.0
  %325 = vmatprep.subr.mxu0 0.0
  %326 = vmatpush1.msra.mxu0 0.0
  %327 = vmatprep.subr.mxu0 0.0
  %328 = vmatpush1.msra.mxu0 0.0
  %329 = vmatprep.subr.mxu0 0.0
  %330 = vmatpush1.msra.mxu0 0.0
  %331 = vmatprep.subr.mxu0 0.0
  %332 = vmatpush1.msra.mxu0 0.0
  %333 = vmatprep.subr.mxu0 0.0
  %334 = vmatpush1.msra.mxu0 0.0
  %335 = vmatprep.subr.mxu0 0.0
  %336 = vmatpush1.msra.mxu0 0.0
  %337 = vmatprep.subr.mxu0 0.0
  %338 = vmatpush1.msra.mxu0 0.0
  %339 = vmatprep.subr.mxu0 0.0
  %340 = vmatpush1.msra.mxu0 0.0
  %341 = vmatprep.mubr.f32.mxu0 0.0
  %342 = vmatmul.mubr.f32.gmra.mrb[0].mxu0 %v275
  %v343 = vpop.f32.mrb[0].mxu0
  %v344 = vadd.f32 %v267, %v343
  %v345 = vpop.f32.mrb[0].mxu0
  %346 = vdwg.mxu0
  %v347 = vadd.f32 %v344, %v117
  %v348 = vtanh.pop %v347
  %349 = vmatprep.subr.mxu0 0.0
  %350 = vmatpush1.msra.mxu0 %v21
  %351 = vmatprep.subr.mxu0 0.0
  %352 = vmatpush1.msra.mxu0 0.0
  %353 = vmatprep.subr.mxu0 0.0
  %354 = vmatpush1.msra.mxu0 0.0
  %355 = vmatprep.subr.mxu0 0.0
  %356 = vmatpush1.msra.mxu0 0.0
  %357 = vmatprep.subr.mxu0 0.0
  %358 = vmatpush1.msra.mxu0 0.0
  %359 = vmatprep.subr.mxu0 0.0
  %360 = vmatpush1.msra.mxu0 0.0
  %361 = vmatprep.subr.mxu0 0.0
  %362 = vmatpush1.msra.mxu0 0.0
  %363 = vmatprep.subr.mxu0 0.0
  %364 = vmatpush1.msra.mxu0 0.0
  %365 = vmatprep.subr.mxu0 0.0
  %366 = vmatpush1.msra.mxu0 0.0
  %367 = vmatprep.subr.mxu0 0.0
  %368 = vmatpush1.msra.mxu0 0.0
  %369 = vmatprep.subr.mxu0 0.0
  %370 = vmatpush1.msra.mxu0 0.0
  %371 = vmatprep.subr.mxu0 0.0
  %372 = vmatpush1.msra.mxu0 0.0
  %373 = vmatprep.subr.mxu0 0.0
  %374 = vmatpush1.msra.mxu0 0.0
  %375 = vmatprep.subr.mxu0 0.0
  %376 = vmatpush1.msra.mxu0 0.0
  %377 = vmatprep.subr.mxu0 0.0
  %378 = vmatpush1.msra.mxu0 0.0
  %379 = vmatprep.subr.mxu0 0.0
  %380 = vmatpush1.msra.mxu0 0.0
  %381 = vmatprep.subr.mxu0 0.0
  %382 = vmatpush1.msra.mxu0 0.0
  %383 = vmatprep.subr.mxu0 0.0
  %384 = vmatpush1.msra.mxu0 0.0
  %385 = vmatprep.subr.mxu0 0.0
  %386 = vmatpush1.msra.mxu0 0.0
  %387 = vmatprep.subr.mxu0 0.0
  %388 = vmatpush1.msra.mxu0 0.0
  %389 = vmatprep.subr.mxu0 0.0
  %390 = vmatpush1.msra.mxu0 0.0
  %391 = vmatprep.subr.mxu0 0.0
  %392 = vmatpush1.msra.mxu0 0.0
  %393 = vmatprep.subr.mxu0 0.0
  %394 = vmatpush1.msra.mxu0 0.0
  %395 = vmatprep.subr.mxu0 0.0
  %396 = vmatpush1.msra.mxu0 0.0
  %397 = vmatprep.subr.mxu0 0.0
  %398 = vmatpush1.msra.mxu0 0.0
  %399 = vmatprep.subr.mxu0 0.0
  %400 = vmatpush1.msra.mxu0 0.0
  %401 = vmatprep.subr.mxu0 0.0
  %402 = vmatpush1.msra.mxu0 0.0
  %403 = vmatprep.subr.mxu0 0.0
  %404 = vmatpush1.msra.mxu0 0.0
  %405 = vmatprep.subr.mxu0 0.0
  %406 = vmatpush1.msra.mxu0 0.0
  %407 = vmatprep.subr.mxu0 0.0
  %408 = vmatpush1.msra.mxu0 0.0
  %409 = vmatprep.subr.mxu0 0.0
  %410 = vmatpush1.msra.mxu0 0.0
  %411 = vmatprep.subr.mxu0 0.0
  %412 = vmatpush1.msra.mxu0 0.0
  %413 = vmatprep.mubr.f32.mxu0 0.0
  %414 = vmatmul.mubr.f32.gmra.mrb[0].mxu0 %v275
  %v415 = vpop.f32.mrb[0].mxu0
  %v416 = vadd.f32 0.0, %v415
  %v417 = vpop.f32.mrb[0].mxu0
  %418 = vdwg.mxu0
  %v420 = vrot.slane %v416, 7
  %v423 = vadd.f32 %v106, %v420
  %v424 = vadd.f32 %v111, %v416
  %v425 = vtanh.pop %v423
  %v426 = vtanh.pop %v424
  %v428 = vsel %vm118, %v348, 0
  %430 = vmatprep.subr.mxu0 0.0
  %431 = vmatpush1.msra.mxu0 %v24
  %432 = vmatprep.subr.mxu0 0.0
  %433 = vmatpush1.msra.mxu0 0.0
  %434 = vmatprep.subr.mxu0 0.0
  %435 = vmatpush1.msra.mxu0 0.0
  %436 = vmatprep.subr.mxu0 0.0
  %437 = vmatpush1.msra.mxu0 0.0
  %438 = vmatprep.subr.mxu0 0.0
  %439 = vmatpush1.msra.mxu0 0.0
  %440 = vmatprep.subr.mxu0 0.0
  %441 = vmatpush1.msra.mxu0 0.0
  %442 = vmatprep.subr.mxu0 0.0
  %443 = vmatpush1.msra.mxu0 0.0
  %444 = vmatprep.subr.mxu0 0.0
  %445 = vmatpush1.msra.mxu0 0.0
  %446 = vmatprep.subr.mxu0 0.0
  %447 = vmatpush1.msra.mxu0 0.0
  %448 = vmatprep.subr.mxu0 0.0
  %449 = vmatpush1.msra.mxu0 0.0
  %450 = vmatprep.subr.mxu0 0.0
  %451 = vmatpush1.msra.mxu0 0.0
  %452 = vmatprep.subr.mxu0 0.0
  %453 = vmatpush1.msra.mxu0 0.0
  %454 = vmatprep.subr.mxu0 0.0
  %455 = vmatpush1.msra.mxu0 0.0
  %456 = vmatprep.subr.mxu0 0.0
  %457 = vmatpush1.msra.mxu0 0.0
  %458 = vmatprep.subr.mxu0 0.0
  %459 = vmatpush1.msra.mxu0 0.0
  %460 = vmatprep.subr.mxu0 0.0
  %461 = vmatpush1.msra.mxu0 0.0
  %462 = vmatprep.subr.mxu0 0.0
  %463 = vmatpush1.msra.mxu0 0.0
  %464 = vmatprep.subr.mxu0 0.0
  %465 = vmatpush1.msra.mxu0 0.0
  %466 = vmatprep.subr.mxu0 0.0
  %467 = vmatpush1.msra.mxu0 0.0
  %468 = vmatprep.subr.mxu0 0.0
  %469 = vmatpush1.msra.mxu0 0.0
  %470 = vmatprep.subr.mxu0 0.0
  %471 = vmatpush1.msra.mxu0 0.0
  %472 = vmatprep.subr.mxu0 0.0
  %473 = vmatpush1.msra.mxu0 0.0
  %474 = vmatprep.subr.mxu0 0.0
  %475 = vmatpush1.msra.mxu0 0.0
  %476 = vmatprep.subr.mxu0 0.0
  %477 = vmatpush1.msra.mxu0 0.0
  %478 = vmatprep.subr.mxu0 0.0
  %479 = vmatpush1.msra.mxu0 0.0
  %480 = vmatprep.subr.mxu0 0.0
  %481 = vmatpush1.msra.mxu0 0.0
  %482 = vmatprep.subr.mxu0 0.0
  %483 = vmatpush1.msra.mxu0 0.0
  %484 = vmatprep.subr.mxu0 0.0
  %485 = vmatpush1.msra.mxu0 0.0
  %486 = vmatprep.subr.mxu0 0.0
  %487 = vmatpush1.msra.mxu0 0.0
  %488 = vmatprep.subr.mxu0 0.0
  %489 = vmatpush1.msra.mxu0 0.0
  %490 = vmatprep.subr.mxu0 0.0
  %491 = vmatpush1.msra.mxu0 0.0
  %492 = vmatprep.subr.mxu0 0.0
  %493 = vmatpush1.msra.mxu0 0.0
  %494 = vmatprep.mubr.f32.mxu0 0.0
  %495 = vmatmul.mubr.f32.gmra.mrb[0].mxu0 %v428
  %v496 = vpop.f32.mrb[0].mxu0
  %v497 = vadd.f32 0.0, %v496
  %v498 = vpop.f32.mrb[0].mxu0
  %499 = vdwg.mxu0
  %v502 = vrot.slane %v425, 1
  %v503 = vsel %vm273, %v426, %v502
  %v504 = vsel %vm118, %v503, 0
  %506 = vmatprep.subr.mxu0 0.0
  %507 = vmatpush1.msra.mxu0 %v23
  %508 = vmatprep.subr.mxu0 0.0
  %509 = vmatpush1.msra.mxu0 0.0
  %510 = vmatprep.subr.mxu0 0.0
  %511 = vmatpush1.msra.mxu0 0.0
  %512 = vmatprep.subr.mxu0 0.0
  %513 = vmatpush1.msra.mxu0 0.0
  %514 = vmatprep.subr.mxu0 0.0
  %515 = vmatpush1.msra.mxu0 0.0
  %516 = vmatprep.subr.mxu0 0.0
  %517 = vmatpush1.msra.mxu0 0.0
  %518 = vmatprep.subr.mxu0 0.0
  %519 = vmatpush1.msra.mxu0 0.0
  %520 = vmatprep.subr.mxu0 0.0
  %521 = vmatpush1.msra.mxu0 0.0
  %522 = vmatprep.subr.mxu0 0.0
  %523 = vmatpush1.msra.mxu0 0.0
  %524 = vmatprep.subr.mxu0 0.0
  %525 = vmatpush1.msra.mxu0 0.0
  %526 = vmatprep.subr.mxu0 0.0
  %527 = vmatpush1.msra.mxu0 0.0
  %528 = vmatprep.subr.mxu0 0.0
  %529 = vmatpush1.msra.mxu0 0.0
  %530 = vmatprep.subr.mxu0 0.0
  %531 = vmatpush1.msra.mxu0 0.0
  %532 = vmatprep.subr.mxu0 0.0
  %533 = vmatpush1.msra.mxu0 0.0
  %534 = vmatprep.subr.mxu0 0.0
  %535 = vmatpush1.msra.mxu0 0.0
  %536 = vmatprep.subr.mxu0 0.0
  %537 = vmatpush1.msra.mxu0 0.0
  %538 = vmatprep.subr.mxu0 0.0
  %539 = vmatpush1.msra.mxu0 0.0
  %540 = vmatprep.subr.mxu0 0.0
  %541 = vmatpush1.msra.mxu0 0.0
  %542 = vmatprep.subr.mxu0 0.0
  %543 = vmatpush1.msra.mxu0 0.0
  %544 = vmatprep.subr.mxu0 0.0
  %545 = vmatpush1.msra.mxu0 0.0
  %546 = vmatprep.subr.mxu0 0.0
  %547 = vmatpush1.msra.mxu0 0.0
  %548 = vmatprep.subr.mxu0 0.0
  %549 = vmatpush1.msra.mxu0 0.0
  %550 = vmatprep.subr.mxu0 0.0
  %551 = vmatpush1.msra.mxu0 0.0
  %552 = vmatprep.subr.mxu0 0.0
  %553 = vmatpush1.msra.mxu0 0.0
  %554 = vmatprep.subr.mxu0 0.0
  %555 = vmatpush1.msra.mxu0 0.0
  %556 = vmatprep.subr.mxu0 0.0
  %557 = vmatpush1.msra.mxu0 0.0
  %558 = vmatprep.subr.mxu0 0.0
  %559 = vmatpush1.msra.mxu0 0.0
  %560 = vmatprep.subr.mxu0 0.0
  %561 = vmatpush1.msra.mxu0 0.0
  %562 = vmatprep.subr.mxu0 0.0
  %563 = vmatpush1.msra.mxu0 0.0
  %564 = vmatprep.subr.mxu0 0.0
  %565 = vmatpush1.msra.mxu0 0.0
  %566 = vmatprep.subr.mxu0 0.0
  %567 = vmatpush1.msra.mxu0 0.0
  %568 = vmatprep.subr.mxu0 0.0
  %569 = vmatpush1.msra.mxu0 0.0
  %570 = vmatprep.mubr.f32.mxu0 0.0
  %571 = vmatmul.mubr.f32.gmra.mrb[0].mxu0 %v504
  %v572 = vpop.f32.mrb[0].mxu0
  %v573 = vadd.f32 %v497, %v572
  %v574 = vpop.f32.mrb[0].mxu0
  %575 = vdwg.mxu0
  %v576 = vadd.f32 %v573, %v117
  %v577 = vtanh.pop %v576
  %578 = vmatprep.subr.mxu0 0.0
  %579 = vmatpush1.msra.mxu0 %v21
  %580 = vmatprep.subr.mxu0 0.0
  %581 = vmatpush1.msra.mxu0 0.0
  %582 = vmatprep.subr.mxu0 0.0
  %583 = vmatpush1.msra.mxu0 0.0
  %584 = vmatprep.subr.mxu0 0.0
  %585 = vmatpush1.msra.mxu0 0.0
  %586 = vmatprep.subr.mxu0 0.0
  %587 = vmatpush1.msra.mxu0 0.0
  %588 = vmatprep.subr.mxu0 0.0
  %589 = vmatpush1.msra.mxu0 0.0
  %590 = vmatprep.subr.mxu0 0.0
  %591 = vmatpush1.msra.mxu0 0.0
  %592 = vmatprep.subr.mxu0 0.0
  %593 = vmatpush1.msra.mxu0 0.0
  %594 = vmatprep.subr.mxu0 0.0
  %595 = vmatpush1.msra.mxu0 0.0
  %596 = vmatprep.subr.mxu0 0.0
  %597 = vmatpush1.msra.mxu0 0.0
  %598 = vmatprep.subr.mxu0 0.0
  %599 = vmatpush1.msra.mxu0 0.0
  %600 = vmatprep.subr.mxu0 0.0
  %601 = vmatpush1.msra.mxu0 0.0
  %602 = vmatprep.subr.mxu0 0.0
  %603 = vmatpush1.msra.mxu0 0.0
  %604 = vmatprep.subr.mxu0 0.0
  %605 = vmatpush1.msra.mxu0 0.0
  %606 = vmatprep.subr.mxu0 0.0
  %607 = vmatpush1.msra.mxu0 0.0
  %608 = vmatprep.subr.mxu0 0.0
  %609 = vmatpush1.msra.mxu0 0.0
  %610 = vmatprep.subr.mxu0 0.0
  %611 = vmatpush1.msra.mxu0 0.0
  %612 = vmatprep.subr.mxu0 0.0
  %613 = vmatpush1.msra.mxu0 0.0
  %614 = vmatprep.subr.mxu0 0.0
  %615 = vmatpush1.msra.mxu0 0.0
  %616 = vmatprep.subr.mxu0 0.0
  %617 = vmatpush1.msra.mxu0 0.0
  %618 = vmatprep.subr.mxu0 0.0
  %619 = vmatpush1.msra.mxu0 0.0
  %620 = vmatprep.subr.mxu0 0.0
  %621 = vmatpush1.msra.mxu0 0.0
  %622 = vmatprep.subr.mxu0 0.0
  %623 = vmatpush1.msra.mxu0 0.0
  %624 = vmatprep.subr.mxu0 0.0
  %625 = vmatpush1.msra.mxu0 0.0
  %626 = vmatprep.subr.mxu0 0.0
  %627 = vmatpush1.msra.mxu0 0.0
  %628 = vmatprep.subr.mxu0 0.0
  %629 = vmatpush1.msra.mxu0 0.0
  %630 = vmatprep.subr.mxu0 0.0
  %631 = vmatpush1.msra.mxu0 0.0
  %632 = vmatprep.subr.mxu0 0.0
  %633 = vmatpush1.msra.mxu0 0.0
  %634 = vmatprep.subr.mxu0 0.0
  %635 = vmatpush1.msra.mxu0 0.0
  %636 = vmatprep.subr.mxu0 0.0
  %637 = vmatpush1.msra.mxu0 0.0
  %638 = vmatprep.subr.mxu0 0.0
  %639 = vmatpush1.msra.mxu0 0.0
  %640 = vmatprep.subr.mxu0 0.0
  %641 = vmatpush1.msra.mxu0 0.0
  %642 = vmatprep.mubr.f32.mxu0 0.0
  %643 = vmatmul.mubr.f32.gmra.mrb[0].mxu0 %v504
  %v644 = vpop.f32.mrb[0].mxu0
  %v645 = vadd.f32 0.0, %v644
  %v646 = vpop.f32.mrb[0].mxu0
  %647 = vdwg.mxu0
  %v649 = vrot.slane %v645, 6
  %v650 = vrot.slane %v645, 7
  %v653 = vadd.f32 %v106, %v649
  %v654 = vadd.f32 %v111, %v650
  %v655 = vtanh.pop %v653
  %v656 = vtanh.pop %v654
  %v658 = vsel %vm118, %v577, 0
  %660 = vmatprep.subr.mxu0 0.0
  %661 = vmatpush1.msra.mxu0 %v24
  %662 = vmatprep.subr.mxu0 0.0
  %663 = vmatpush1.msra.mxu0 0.0
  %664 = vmatprep.subr.mxu0 0.0
  %665 = vmatpush1.msra.mxu0 0.0
  %666 = vmatprep.subr.mxu0 0.0
  %667 = vmatpush1.msra.mxu0 0.0
  %668 = vmatprep.subr.mxu0 0.0
  %669 = vmatpush1.msra.mxu0 0.0
  %670 = vmatprep.subr.mxu0 0.0
  %671 = vmatpush1.msra.mxu0 0.0
  %672 = vmatprep.subr.mxu0 0.0
  %673 = vmatpush1.msra.mxu0 0.0
  %674 = vmatprep.subr.mxu0 0.0
  %675 = vmatpush1.msra.mxu0 0.0
  %676 = vmatprep.subr.mxu0 0.0
  %677 = vmatpush1.msra.mxu0 0.0
  %678 = vmatprep.subr.mxu0 0.0
  %679 = vmatpush1.msra.mxu0 0.0
  %680 = vmatprep.subr.mxu0 0.0
  %681 = vmatpush1.msra.mxu0 0.0
  %682 = vmatprep.subr.mxu0 0.0
  %683 = vmatpush1.msra.mxu0 0.0
  %684 = vmatprep.subr.mxu0 0.0
  %685 = vmatpush1.msra.mxu0 0.0
  %686 = vmatprep.subr.mxu0 0.0
  %687 = vmatpush1.msra.mxu0 0.0
  %688 = vmatprep.subr.mxu0 0.0
  %689 = vmatpush1.msra.mxu0 0.0
  %690 = vmatprep.subr.mxu0 0.0
  %691 = vmatpush1.msra.mxu0 0.0
  %692 = vmatprep.subr.mxu0 0.0
  %693 = vmatpush1.msra.mxu0 0.0
  %694 = vmatprep.subr.mxu0 0.0
  %695 = vmatpush1.msra.mxu0 0.0
  %696 = vmatprep.subr.mxu0 0.0
  %697 = vmatpush1.msra.mxu0 0.0
  %698 = vmatprep.subr.mxu0 0.0
  %699 = vmatpush1.msra.mxu0 0.0
  %700 = vmatprep.subr.mxu0 0.0
  %701 = vmatpush1.msra.mxu0 0.0
  %702 = vmatprep.subr.mxu0 0.0
  %703 = vmatpush1.msra.mxu0 0.0
  %704 = vmatprep.subr.mxu0 0.0
  %705 = vmatpush1.msra.mxu0 0.0
  %706 = vmatprep.subr.mxu0 0.0
  %707 = vmatpush1.msra.mxu0 0.0
  %708 = vmatprep.subr.mxu0 0.0
  %709 = vmatpush1.msra.mxu0 0.0
  %710 = vmatprep.subr.mxu0 0.0
  %711 = vmatpush1.msra.mxu0 0.0
  %712 = vmatprep.subr.mxu0 0.0
  %713 = vmatpush1.msra.mxu0 0.0
  %714 = vmatprep.subr.mxu0 0.0
  %715 = vmatpush1.msra.mxu0 0.0
  %716 = vmatprep.subr.mxu0 0.0
  %717 = vmatpush1.msra.mxu0 0.0
  %718 = vmatprep.subr.mxu0 0.0
  %719 = vmatpush1.msra.mxu0 0.0
  %720 = vmatprep.subr.mxu0 0.0
  %721 = vmatpush1.msra.mxu0 0.0
  %722 = vmatprep.subr.mxu0 0.0
  %723 = vmatpush1.msra.mxu0 0.0
  %724 = vmatprep.mubr.f32.mxu0 0.0
  %725 = vmatmul.mubr.f32.gmra.mrb[0].mxu0 %v658
  %v726 = vpop.f32.mrb[0].mxu0
  %v727 = vadd.f32 0.0, %v726
  %v728 = vpop.f32.mrb[0].mxu0
  %729 = vdwg.mxu0
  %v732 = vrot.slane %v655, 2
  %v733 = vrot.slane %v656, 1
  %v734 = vsel %vm273, %v733, %v732
  %v735 = vsel %vm118, %v734, 0
  %737 = vmatprep.subr.mxu0 0.0
  %738 = vmatpush1.msra.mxu0 %v23
  %739 = vmatprep.subr.mxu0 0.0
  %740 = vmatpush1.msra.mxu0 0.0
  %741 = vmatprep.subr.mxu0 0.0
  %742 = vmatpush1.msra.mxu0 0.0
  %743 = vmatprep.subr.mxu0 0.0
  %744 = vmatpush1.msra.mxu0 0.0
  %745 = vmatprep.subr.mxu0 0.0
  %746 = vmatpush1.msra.mxu0 0.0
  %747 = vmatprep.subr.mxu0 0.0
  %748 = vmatpush1.msra.mxu0 0.0
  %749 = vmatprep.subr.mxu0 0.0
  %750 = vmatpush1.msra.mxu0 0.0
  %751 = vmatprep.subr.mxu0 0.0
  %752 = vmatpush1.msra.mxu0 0.0
  %753 = vmatprep.subr.mxu0 0.0
  %754 = vmatpush1.msra.mxu0 0.0
  %755 = vmatprep.subr.mxu0 0.0
  %756 = vmatpush1.msra.mxu0 0.0
  %757 = vmatprep.subr.mxu0 0.0
  %758 = vmatpush1.msra.mxu0 0.0
  %759 = vmatprep.subr.mxu0 0.0
  %760 = vmatpush1.msra.mxu0 0.0
  %761 = vmatprep.subr.mxu0 0.0
  %762 = vmatpush1.msra.mxu0 0.0
  %763 = vmatprep.subr.mxu0 0.0
  %764 = vmatpush1.msra.mxu0 0.0
  %765 = vmatprep.subr.mxu0 0.0
  %766 = vmatpush1.msra.mxu0 0.0
  %767 = vmatprep.subr.mxu0 0.0
  %768 = vmatpush1.msra.mxu0 0.0
  %769 = vmatprep.subr.mxu0 0.0
  %770 = vmatpush1.msra.mxu0 0.0
  %771 = vmatprep.subr.mxu0 0.0
  %772 = vmatpush1.msra.mxu0 0.0
  %773 = vmatprep.subr.mxu0 0.0
  %774 = vmatpush1.msra.mxu0 0.0
  %775 = vmatprep.subr.mxu0 0.0
  %776 = vmatpush1.msra.mxu0 0.0
  %777 = vmatprep.subr.mxu0 0.0
  %778 = vmatpush1.msra.mxu0 0.0
  %779 = vmatprep.subr.mxu0 0.0
  %780 = vmatpush1.msra.mxu0 0.0
  %781 = vmatprep.subr.mxu0 0.0
  %782 = vmatpush1.msra.mxu0 0.0
  %783 = vmatprep.subr.mxu0 0.0
  %784 = vmatpush1.msra.mxu0 0.0
  %785 = vmatprep.subr.mxu0 0.0
  %786 = vmatpush1.msra.mxu0 0.0
  %787 = vmatprep.subr.mxu0 0.0
  %788 = vmatpush1.msra.mxu0 0.0
  %789 = vmatprep.subr.mxu0 0.0
  %790 = vmatpush1.msra.mxu0 0.0
  %791 = vmatprep.subr.mxu0 0.0
  %792 = vmatpush1.msra.mxu0 0.0
  %793 = vmatprep.subr.mxu0 0.0
  %794 = vmatpush1.msra.mxu0 0.0
  %795 = vmatprep.subr.mxu0 0.0
  %796 = vmatpush1.msra.mxu0 0.0
  %797 = vmatprep.subr.mxu0 0.0
  %798 = vmatpush1.msra.mxu0 0.0
  %799 = vmatprep.subr.mxu0 0.0
  %800 = vmatpush1.msra.mxu0 0.0
  %801 = vmatprep.mubr.f32.mxu0 0.0
  %802 = vmatmul.mubr.f32.gmra.mrb[0].mxu0 %v735
  %v803 = vpop.f32.mrb[0].mxu0
  %v804 = vadd.f32 %v727, %v803
  %v805 = vpop.f32.mrb[0].mxu0
  %806 = vdwg.mxu0
  %v807 = vadd.f32 %v804, %v117
  %v808 = vtanh.pop %v807
  %809 = vmatprep.subr.mxu0 0.0
  %810 = vmatpush1.msra.mxu0 %v21
  %811 = vmatprep.subr.mxu0 0.0
  %812 = vmatpush1.msra.mxu0 0.0
  %813 = vmatprep.subr.mxu0 0.0
  %814 = vmatpush1.msra.mxu0 0.0
  %815 = vmatprep.subr.mxu0 0.0
  %816 = vmatpush1.msra.mxu0 0.0
  %817 = vmatprep.subr.mxu0 0.0
  %818 = vmatpush1.msra.mxu0 0.0
  %819 = vmatprep.subr.mxu0 0.0
  %820 = vmatpush1.msra.mxu0 0.0
  %821 = vmatprep.subr.mxu0 0.0
  %822 = vmatpush1.msra.mxu0 0.0
  %823 = vmatprep.subr.mxu0 0.0
  %824 = vmatpush1.msra.mxu0 0.0
  %825 = vmatprep.subr.mxu0 0.0
  %826 = vmatpush1.msra.mxu0 0.0
  %827 = vmatprep.subr.mxu0 0.0
  %828 = vmatpush1.msra.mxu0 0.0
  %829 = vmatprep.subr.mxu0 0.0
  %830 = vmatpush1.msra.mxu0 0.0
  %831 = vmatprep.subr.mxu0 0.0
  %832 = vmatpush1.msra.mxu0 0.0
  %833 = vmatprep.subr.mxu0 0.0
  %834 = vmatpush1.msra.mxu0 0.0
  %835 = vmatprep.subr.mxu0 0.0
  %836 = vmatpush1.msra.mxu0 0.0
  %837 = vmatprep.subr.mxu0 0.0
  %838 = vmatpush1.msra.mxu0 0.0
  %839 = vmatprep.subr.mxu0 0.0
  %840 = vmatpush1.msra.mxu0 0.0
  %841 = vmatprep.subr.mxu0 0.0
  %842 = vmatpush1.msra.mxu0 0.0
  %843 = vmatprep.subr.mxu0 0.0
  %844 = vmatpush1.msra.mxu0 0.0
  %845 = vmatprep.subr.mxu0 0.0
  %846 = vmatpush1.msra.mxu0 0.0
  %847 = vmatprep.subr.mxu0 0.0
  %848 = vmatpush1.msra.mxu0 0.0
  %849 = vmatprep.subr.mxu0 0.0
  %850 = vmatpush1.msra.mxu0 0.0
  %851 = vmatprep.subr.mxu0 0.0
  %852 = vmatpush1.msra.mxu0 0.0
  %853 = vmatprep.subr.mxu0 0.0
  %854 = vmatpush1.msra.mxu0 0.0
  %855 = vmatprep.subr.mxu0 0.0
  %856 = vmatpush1.msra.mxu0 0.0
  %857 = vmatprep.subr.mxu0 0.0
  %858 = vmatpush1.msra.mxu0 0.0
  %859 = vmatprep.subr.mxu0 0.0
  %860 = vmatpush1.msra.mxu0 0.0
  %861 = vmatprep.subr.mxu0 0.0
  %862 = vmatpush1.msra.mxu0 0.0
  %863 = vmatprep.subr.mxu0 0.0
  %864 = vmatpush1.msra.mxu0 0.0
  %865 = vmatprep.subr.mxu0 0.0
  %866 = vmatpush1.msra.mxu0 0.0
  %867 = vmatprep.subr.mxu0 0.0
  %868 = vmatpush1.msra.mxu0 0.0
  %869 = vmatprep.subr.mxu0 0.0
  %870 = vmatpush1.msra.mxu0 0.0
  %871 = vmatprep.subr.mxu0 0.0
  %872 = vmatpush1.msra.mxu0 0.0
  %873 = vmatprep.mubr.f32.mxu0 0.0
  %874 = vmatmul.mubr.f32.gmra.mrb[0].mxu0 %v735
  %v875 = vpop.f32.mrb[0].mxu0
  %v876 = vadd.f32 0.0, %v875
  %v877 = vpop.f32.mrb[0].mxu0
  %878 = vdwg.mxu0
  %v880 = vrot.slane %v876, 5
  %v881 = vrot.slane %v876, 6
  %v884 = vadd.f32 %v106, %v880
  %v885 = vadd.f32 %v111, %v881
  %v886 = vtanh.pop %v884
  %v887 = vtanh.pop %v885
  %v889 = vsel %vm118, %v808, 0
  %891 = vmatprep.subr.mxu0 0.0
  %892 = vmatpush1.msra.mxu0 %v24
  %893 = vmatprep.subr.mxu0 0.0
  %894 = vmatpush1.msra.mxu0 0.0
  %895 = vmatprep.subr.mxu0 0.0
  %896 = vmatpush1.msra.mxu0 0.0
  %897 = vmatprep.subr.mxu0 0.0
  %898 = vmatpush1.msra.mxu0 0.0
  %899 = vmatprep.subr.mxu0 0.0
  %900 = vmatpush1.msra.mxu0 0.0
  %901 = vmatprep.subr.mxu0 0.0
  %902 = vmatpush1.msra.mxu0 0.0
  %903 = vmatprep.subr.mxu0 0.0
  %904 = vmatpush1.msra.mxu0 0.0
  %905 = vmatprep.subr.mxu0 0.0
  %906 = vmatpush1.msra.mxu0 0.0
  %907 = vmatprep.subr.mxu0 0.0
  %908 = vmatpush1.msra.mxu0 0.0
  %909 = vmatprep.subr.mxu0 0.0
  %910 = vmatpush1.msra.mxu0 0.0
  %911 = vmatprep.subr.mxu0 0.0
  %912 = vmatpush1.msra.mxu0 0.0
  %913 = vmatprep.subr.mxu0 0.0
  %914 = vmatpush1.msra.mxu0 0.0
  %915 = vmatprep.subr.mxu0 0.0
  %916 = vmatpush1.msra.mxu0 0.0
  %917 = vmatprep.subr.mxu0 0.0
  %918 = vmatpush1.msra.mxu0 0.0
  %919 = vmatprep.subr.mxu0 0.0
  %920 = vmatpush1.msra.mxu0 0.0
  %921 = vmatprep.subr.mxu0 0.0
  %922 = vmatpush1.msra.mxu0 0.0
  %923 = vmatprep.subr.mxu0 0.0
  %924 = vmatpush1.msra.mxu0 0.0
  %925 = vmatprep.subr.mxu0 0.0
  %926 = vmatpush1.msra.mxu0 0.0
  %927 = vmatprep.subr.mxu0 0.0
  %928 = vmatpush1.msra.mxu0 0.0
  %929 = vmatprep.subr.mxu0 0.0
  %930 = vmatpush1.msra.mxu0 0.0
  %931 = vmatprep.subr.mxu0 0.0
  %932 = vmatpush1.msra.mxu0 0.0
  %933 = vmatprep.subr.mxu0 0.0
  %934 = vmatpush1.msra.mxu0 0.0
  %935 = vmatprep.subr.mxu0 0.0
  %936 = vmatpush1.msra.mxu0 0.0
  %937 = vmatprep.subr.mxu0 0.0
  %938 = vmatpush1.msra.mxu0 0.0
  %939 = vmatprep.subr.mxu0 0.0
  %940 = vmatpush1.msra.mxu0 0.0
  %941 = vmatprep.subr.mxu0 0.0
  %942 = vmatpush1.msra.mxu0 0.0
  %943 = vmatprep.subr.mxu0 0.0
  %944 = vmatpush1.msra.mxu0 0.0
  %945 = vmatprep.subr.mxu0 0.0
  %946 = vmatpush1.msra.mxu0 0.0
  %947 = vmatprep.subr.mxu0 0.0
  %948 = vmatpush1.msra.mxu0 0.0
  %949 = vmatprep.subr.mxu0 0.0
  %950 = vmatpush1.msra.mxu0 0.0
  %951 = vmatprep.subr.mxu0 0.0
  %952 = vmatpush1.msra.mxu0 0.0
  %953 = vmatprep.subr.mxu0 0.0
  %954 = vmatpush1.msra.mxu0 0.0
  %955 = vmatprep.mubr.f32.mxu0 0.0
  %956 = vmatmul.mubr.f32.gmra.mrb[0].mxu0 %v889
  %v957 = vpop.f32.mrb[0].mxu0
  %v958 = vadd.f32 0.0, %v957
  %v959 = vpop.f32.mrb[0].mxu0
  %960 = vdwg.mxu0
  %v963 = vrot.slane %v886, 3
  %v964 = vrot.slane %v887, 2
  %v965 = vsel %vm273, %v964, %v963
  %v966 = vsel %vm118, %v965, 0
  %968 = vmatprep.subr.mxu0 0.0
  %969 = vmatpush1.msra.mxu0 %v23
  %970 = vmatprep.subr.mxu0 0.0
  %971 = vmatpush1.msra.mxu0 0.0
  %972 = vmatprep.subr.mxu0 0.0
  %973 = vmatpush1.msra.mxu0 0.0
  %974 = vmatprep.subr.mxu0 0.0
  %975 = vmatpush1.msra.mxu0 0.0
  %976 = vmatprep.subr.mxu0 0.0
  %977 = vmatpush1.msra.mxu0 0.0
  %978 = vmatprep.subr.mxu0 0.0
  %979 = vmatpush1.msra.mxu0 0.0
  %980 = vmatprep.subr.mxu0 0.0
  %981 = vmatpush1.msra.mxu0 0.0
  %982 = vmatprep.subr.mxu0 0.0
  %983 = vmatpush1.msra.mxu0 0.0
  %984 = vmatprep.subr.mxu0 0.0
  %985 = vmatpush1.msra.mxu0 0.0
  %986 = vmatprep.subr.mxu0 0.0
  %987 = vmatpush1.msra.mxu0 0.0
  %988 = vmatprep.subr.mxu0 0.0
  %989 = vmatpush1.msra.mxu0 0.0
  %990 = vmatprep.subr.mxu0 0.0
  %991 = vmatpush1.msra.mxu0 0.0
  %992 = vmatprep.subr.mxu0 0.0
  %993 = vmatpush1.msra.mxu0 0.0
  %994 = vmatprep.subr.mxu0 0.0
  %995 = vmatpush1.msra.mxu0 0.0
  %996 = vmatprep.subr.mxu0 0.0
  %997 = vmatpush1.msra.mxu0 0.0
  %998 = vmatprep.subr.mxu0 0.0
  %999 = vmatpush1.msra.mxu0 0.0
  %1000 = vmatprep.subr.mxu0 0.0
  %1001 = vmatpush1.msra.mxu0 0.0
  %1002 = vmatprep.subr.mxu0 0.0
  %1003 = vmatpush1.msra.mxu0 0.0
  %1004 = vmatprep.subr.mxu0 0.0
  %1005 = vmatpush1.msra.mxu0 0.0
  %1006 = vmatprep.subr.mxu0 0.0
  %1007 = vmatpush1.msra.mxu0 0.0
  %1008 = vmatprep.subr.mxu0 0.0
  %1009 = vmatpush1.msra.mxu0 0.0
  %1010 = vmatprep.subr.mxu0 0.0
  %1011 = vmatpush1.msra.mxu0 0.0
  %1012 = vmatprep.subr.mxu0 0.0
  %1013 = vmatpush1.msra.mxu0 0.0
  %1014 = vmatprep.subr.mxu0 0.0
  %1015 = vmatpush1.msra.mxu0 0.0
  %1016 = vmatprep.subr.mxu0 0.0
  %1017 = vmatpush1.msra.mxu0 0.0
  %1018 = vmatprep.subr.mxu0 0.0
  %1019 = vmatpush1.msra.mxu0 0.0
  %1020 = vmatprep.subr.mxu0 0.0
  %1021 = vmatpush1.msra.mxu0 0.0
  %1022 = vmatprep.subr.mxu0 0.0
  %1023 = vmatpush1.msra.mxu0 0.0
  %1024 = vmatprep.subr.mxu0 0.0
  %1025 = vmatpush1.msra.mxu0 0.0
  %1026 = vmatprep.subr.mxu0 0.0
  %1027 = vmatpush1.msra.mxu0 0.0
  %1028 = vmatprep.subr.mxu0 0.0
  %1029 = vmatpush1.msra.mxu0 0.0
  %1030 = vmatprep.subr.mxu0 0.0
  %1031 = vmatpush1.msra.mxu0 0.0
  %1032 = vmatprep.mubr.f32.mxu0 0.0
  %1033 = vmatmul.mubr.f32.gmra.mrb[0].mxu0 %v966
  %v1034 = vpop.f32.mrb[0].mxu0
  %v1035 = vadd.f32 %v958, %v1034
  %v1036 = vpop.f32.mrb[0].mxu0
  %1037 = vdwg.mxu0
  %v1038 = vadd.f32 %v1035, %v117
  %v1039 = vtanh.pop %v1038
  %1040 = vmatprep.subr.mxu0 0.0
  %1041 = vmatpush1.msra.mxu0 %v21
  %1042 = vmatprep.subr.mxu0 0.0
  %1043 = vmatpush1.msra.mxu0 0.0
  %1044 = vmatprep.subr.mxu0 0.0
  %1045 = vmatpush1.msra.mxu0 0.0
  %1046 = vmatprep.subr.mxu0 0.0
  %1047 = vmatpush1.msra.mxu0 0.0
  %1048 = vmatprep.subr.mxu0 0.0
  %1049 = vmatpush1.msra.mxu0 0.0
  %1050 = vmatprep.subr.mxu0 0.0
  %1051 = vmatpush1.msra.mxu0 0.0
  %1052 = vmatprep.subr.mxu0 0.0
  %1053 = vmatpush1.msra.mxu0 0.0
  %1054 = vmatprep.subr.mxu0 0.0
  %1055 = vmatpush1.msra.mxu0 0.0
  %1056 = vmatprep.subr.mxu0 0.0
  %1057 = vmatpush1.msra.mxu0 0.0
  %1058 = vmatprep.subr.mxu0 0.0
  %1059 = vmatpush1.msra.mxu0 0.0
  %1060 = vmatprep.subr.mxu0 0.0
  %1061 = vmatpush1.msra.mxu0 0.0
  %1062 = vmatprep.subr.mxu0 0.0
  %1063 = vmatpush1.msra.mxu0 0.0
  %1064 = vmatprep.subr.mxu0 0.0
  %1065 = vmatpush1.msra.mxu0 0.0
  %1066 = vmatprep.subr.mxu0 0.0
  %1067 = vmatpush1.msra.mxu0 0.0
  %1068 = vmatprep.subr.mxu0 0.0
  %1069 = vmatpush1.msra.mxu0 0.0
  %1070 = vmatprep.subr.mxu0 0.0
  %1071 = vmatpush1.msra.mxu0 0.0
  %1072 = vmatprep.subr.mxu0 0.0
  %1073 = vmatpush1.msra.mxu0 0.0
  %1074 = vmatprep.subr.mxu0 0.0
  %1075 = vmatpush1.msra.mxu0 0.0
  %1076 = vmatprep.subr.mxu0 0.0
  %1077 = vmatpush1.msra.mxu0 0.0
  %1078 = vmatprep.subr.mxu0 0.0
  %1079 = vmatpush1.msra.mxu0 0.0
  %1080 = vmatprep.subr.mxu0 0.0
  %1081 = vmatpush1.msra.mxu0 0.0
  %1082 = vmatprep.subr.mxu0 0.0
  %1083 = vmatpush1.msra.mxu0 0.0
  %1084 = vmatprep.subr.mxu0 0.0
  %1085 = vmatpush1.msra.mxu0 0.0
  %1086 = vmatprep.subr.mxu0 0.0
  %1087 = vmatpush1.msra.mxu0 0.0
  %1088 = vmatprep.subr.mxu0 0.0
  %1089 = vmatpush1.msra.mxu0 0.0
  %1090 = vmatprep.subr.mxu0 0.0
  %1091 = vmatpush1.msra.mxu0 0.0
  %1092 = vmatprep.subr.mxu0 0.0
  %1093 = vmatpush1.msra.mxu0 0.0
  %1094 = vmatprep.subr.mxu0 0.0
  %1095 = vmatpush1.msra.mxu0 0.0
  %1096 = vmatprep.subr.mxu0 0.0
  %1097 = vmatpush1.msra.mxu0 0.0
  %1098 = vmatprep.subr.mxu0 0.0
  %1099 = vmatpush1.msra.mxu0 0.0
  %1100 = vmatprep.subr.mxu0 0.0
  %1101 = vmatpush1.msra.mxu0 0.0
  %1102 = vmatprep.subr.mxu0 0.0
  %1103 = vmatpush1.msra.mxu0 0.0
  %1104 = vmatprep.mubr.f32.mxu0 0.0
  %1105 = vmatmul.mubr.f32.gmra.mrb[0].mxu0 %v966
  %v1106 = vpop.f32.mrb[0].mxu0
  %v1107 = vadd.f32 0.0, %v1106
  %v1108 = vpop.f32.mrb[0].mxu0
  %1109 = vdwg.mxu0
  %v1111 = vrot.slane %v1107, 4
  %v1112 = vrot.slane %v1107, 5
  %v1115 = vadd.f32 %v106, %v1111
  %v1116 = vadd.f32 %v111, %v1112
  %v1117 = vtanh.pop %v1115
  %v1118 = vtanh.pop %v1116
  %v1120 = vsel %vm118, %v1039, 0
  %1122 = vmatprep.subr.mxu0 0.0
  %1123 = vmatpush1.msra.mxu0 %v24
  %1124 = vmatprep.subr.mxu0 0.0
  %1125 = vmatpush1.msra.mxu0 0.0
  %1126 = vmatprep.subr.mxu0 0.0
  %1127 = vmatpush1.msra.mxu0 0.0
  %1128 = vmatprep.subr.mxu0 0.0
  %1129 = vmatpush1.msra.mxu0 0.0
  %1130 = vmatprep.subr.mxu0 0.0
  %1131 = vmatpush1.msra.mxu0 0.0
  %1132 = vmatprep.subr.mxu0 0.0
  %1133 = vmatpush1.msra.mxu0 0.0
  %1134 = vmatprep.subr.mxu0 0.0
  %1135 = vmatpush1.msra.mxu0 0.0
  %1136 = vmatprep.subr.mxu0 0.0
  %1137 = vmatpush1.msra.mxu0 0.0
  %1138 = vmatprep.subr.mxu0 0.0
  %1139 = vmatpush1.msra.mxu0 0.0
  %1140 = vmatprep.subr.mxu0 0.0
  %1141 = vmatpush1.msra.mxu0 0.0
  %1142 = vmatprep.subr.mxu0 0.0
  %1143 = vmatpush1.msra.mxu0 0.0
  %1144 = vmatprep.subr.mxu0 0.0
  %1145 = vmatpush1.msra.mxu0 0.0
  %1146 = vmatprep.subr.mxu0 0.0
  %1147 = vmatpush1.msra.mxu0 0.0
  %1148 = vmatprep.subr.mxu0 0.0
  %1149 = vmatpush1.msra.mxu0 0.0
  %1150 = vmatprep.subr.mxu0 0.0
  %1151 = vmatpush1.msra.mxu0 0.0
  %1152 = vmatprep.subr.mxu0 0.0
  %1153 = vmatpush1.msra.mxu0 0.0
  %1154 = vmatprep.subr.mxu0 0.0
  %1155 = vmatpush1.msra.mxu0 0.0
  %1156 = vmatprep.subr.mxu0 0.0
  %1157 = vmatpush1.msra.mxu0 0.0
  %1158 = vmatprep.subr.mxu0 0.0
  %1159 = vmatpush1.msra.mxu0 0.0
  %1160 = vmatprep.subr.mxu0 0.0
  %1161 = vmatpush1.msra.mxu0 0.0
  %1162 = vmatprep.subr.mxu0 0.0
  %1163 = vmatpush1.msra.mxu0 0.0
  %1164 = vmatprep.subr.mxu0 0.0
  %1165 = vmatpush1.msra.mxu0 0.0
  %1166 = vmatprep.subr.mxu0 0.0
  %1167 = vmatpush1.msra.mxu0 0.0
  %1168 = vmatprep.subr.mxu0 0.0
  %1169 = vmatpush1.msra.mxu0 0.0
  %1170 = vmatprep.subr.mxu0 0.0
  %1171 = vmatpush1.msra.mxu0 0.0
  %1172 = vmatprep.subr.mxu0 0.0
  %1173 = vmatpush1.msra.mxu0 0.0
  %1174 = vmatprep.subr.mxu0 0.0
  %1175 = vmatpush1.msra.mxu0 0.0
  %1176 = vmatprep.subr.mxu0 0.0
  %1177 = vmatpush1.msra.mxu0 0.0
  %1178 = vmatprep.subr.mxu0 0.0
  %1179 = vmatpush1.msra.mxu0 0.0
  %1180 = vmatprep.subr.mxu0 0.0
  %1181 = vmatpush1.msra.mxu0 0.0
  %1182 = vmatprep.subr.mxu0 0.0
  %1183 = vmatpush1.msra.mxu0 0.0
  %1184 = vmatprep.subr.mxu0 0.0
  %1185 = vmatpush1.msra.mxu0 0.0
  %1186 = vmatprep.mubr.f32.mxu0 0.0
  %1187 = vmatmul.mubr.f32.gmra.mrb[0].mxu0 %v1120
  %v1188 = vpop.f32.mrb[0].mxu0
  %v1189 = vadd.f32 0.0, %v1188
  %v1190 = vpop.f32.mrb[0].mxu0
  %1191 = vdwg.mxu0
  %v1194 = vrot.slane %v1117, 4
  %v1195 = vrot.slane %v1118, 3
  %v1196 = vsel %vm273, %v1195, %v1194
  %v1197 = vsel %vm118, %v1196, 0
  %1199 = vmatprep.subr.mxu0 0.0
  %1200 = vmatpush1.msra.mxu0 %v23
  %1201 = vmatprep.subr.mxu0 0.0
  %1202 = vmatpush1.msra.mxu0 0.0
  %1203 = vmatprep.subr.mxu0 0.0
  %1204 = vmatpush1.msra.mxu0 0.0
  %1205 = vmatprep.subr.mxu0 0.0
  %1206 = vmatpush1.msra.mxu0 0.0
  %1207 = vmatprep.subr.mxu0 0.0
  %1208 = vmatpush1.msra.mxu0 0.0
  %1209 = vmatprep.subr.mxu0 0.0
  %1210 = vmatpush1.msra.mxu0 0.0
  %1211 = vmatprep.subr.mxu0 0.0
  %1212 = vmatpush1.msra.mxu0 0.0
  %1213 = vmatprep.subr.mxu0 0.0
  %1214 = vmatpush1.msra.mxu0 0.0
  %1215 = vmatprep.subr.mxu0 0.0
  %1216 = vmatpush1.msra.mxu0 0.0
  %1217 = vmatprep.subr.mxu0 0.0
  %1218 = vmatpush1.msra.mxu0 0.0
  %1219 = vmatprep.subr.mxu0 0.0
  %1220 = vmatpush1.msra.mxu0 0.0
  %1221 = vmatprep.subr.mxu0 0.0
  %1222 = vmatpush1.msra.mxu0 0.0
  %1223 = vmatprep.subr.mxu0 0.0
  %1224 = vmatpush1.msra.mxu0 0.0
  %1225 = vmatprep.subr.mxu0 0.0
  %1226 = vmatpush1.msra.mxu0 0.0
  %1227 = vmatprep.subr.mxu0 0.0
  %1228 = vmatpush1.msra.mxu0 0.0
  %1229 = vmatprep.subr.mxu0 0.0
  %1230 = vmatpush1.msra.mxu0 0.0
  %1231 = vmatprep.subr.mxu0 0.0
  %1232 = vmatpush1.msra.mxu0 0.0
  %1233 = vmatprep.subr.mxu0 0.0
  %1234 = vmatpush1.msra.mxu0 0.0
  %1235 = vmatprep.subr.mxu0 0.0
  %1236 = vmatpush1.msra.mxu0 0.0
  %1237 = vmatprep.subr.mxu0 0.0
  %1238 = vmatpush1.msra.mxu0 0.0
  %1239 = vmatprep.subr.mxu0 0.0
  %1240 = vmatpush1.msra.mxu0 0.0
  %1241 = vmatprep.subr.mxu0 0.0
  %1242 = vmatpush1.msra.mxu0 0.0
  %1243 = vmatprep.subr.mxu0 0.0
  %1244 = vmatpush1.msra.mxu0 0.0
  %1245 = vmatprep.subr.mxu0 0.0
  %1246 = vmatpush1.msra.mxu0 0.0
  %1247 = vmatprep.subr.mxu0 0.0
  %1248 = vmatpush1.msra.mxu0 0.0
  %1249 = vmatprep.subr.mxu0 0.0
  %1250 = vmatpush1.msra.mxu0 0.0
  %1251 = vmatprep.subr.mxu0 0.0
  %1252 = vmatpush1.msra.mxu0 0.0
  %1253 = vmatprep.subr.mxu0 0.0
  %1254 = vmatpush1.msra.mxu0 0.0
  %1255 = vmatprep.subr.mxu0 0.0
  %1256 = vmatpush1.msra.mxu0 0.0
  %1257 = vmatprep.subr.mxu0 0.0
  %1258 = vmatpush1.msra.mxu0 0.0
  %1259 = vmatprep.subr.mxu0 0.0
  %1260 = vmatpush1.msra.mxu0 0.0
  %1261 = vmatprep.subr.mxu0 0.0
  %1262 = vmatpush1.msra.mxu0 0.0
  %1263 = vmatprep.mubr.f32.mxu0 0.0
  %1264 = vmatmul.mubr.f32.gmra.mrb[0].mxu0 %v1197
  %v1265 = vpop.f32.mrb[0].mxu0
  %v1266 = vadd.f32 %v1189, %v1265
  %v1267 = vpop.f32.mrb[0].mxu0
  %1268 = vdwg.mxu0
  %v1269 = vadd.f32 %v1266, %v117
  %v1270 = vtanh.pop %v1269
  %1271 = vmatprep.subr.mxu0 0.0
  %1272 = vmatpush1.msra.mxu0 %v21
  %1273 = vmatprep.subr.mxu0 0.0
  %1274 = vmatpush1.msra.mxu0 0.0
  %1275 = vmatprep.subr.mxu0 0.0
  %1276 = vmatpush1.msra.mxu0 0.0
  %1277 = vmatprep.subr.mxu0 0.0
  %1278 = vmatpush1.msra.mxu0 0.0
  %1279 = vmatprep.subr.mxu0 0.0
  %1280 = vmatpush1.msra.mxu0 0.0
  %1281 = vmatprep.subr.mxu0 0.0
  %1282 = vmatpush1.msra.mxu0 0.0
  %1283 = vmatprep.subr.mxu0 0.0
  %1284 = vmatpush1.msra.mxu0 0.0
  %1285 = vmatprep.subr.mxu0 0.0
  %1286 = vmatpush1.msra.mxu0 0.0
  %1287 = vmatprep.subr.mxu0 0.0
  %1288 = vmatpush1.msra.mxu0 0.0
  %1289 = vmatprep.subr.mxu0 0.0
  %1290 = vmatpush1.msra.mxu0 0.0
  %1291 = vmatprep.subr.mxu0 0.0
  %1292 = vmatpush1.msra.mxu0 0.0
  %1293 = vmatprep.subr.mxu0 0.0
  %1294 = vmatpush1.msra.mxu0 0.0
  %1295 = vmatprep.subr.mxu0 0.0
  %1296 = vmatpush1.msra.mxu0 0.0
  %1297 = vmatprep.subr.mxu0 0.0
  %1298 = vmatpush1.msra.mxu0 0.0
  %1299 = vmatprep.subr.mxu0 0.0
  %1300 = vmatpush1.msra.mxu0 0.0
  %1301 = vmatprep.subr.mxu0 0.0
  %1302 = vmatpush1.msra.mxu0 0.0
  %1303 = vmatprep.subr.mxu0 0.0
  %1304 = vmatpush1.msra.mxu0 0.0
  %1305 = vmatprep.subr.mxu0 0.0
  %1306 = vmatpush1.msra.mxu0 0.0
  %1307 = vmatprep.subr.mxu0 0.0
  %1308 = vmatpush1.msra.mxu0 0.0
  %1309 = vmatprep.subr.mxu0 0.0
  %1310 = vmatpush1.msra.mxu0 0.0
  %1311 = vmatprep.subr.mxu0 0.0
  %1312 = vmatpush1.msra.mxu0 0.0
  %1313 = vmatprep.subr.mxu0 0.0
  %1314 = vmatpush1.msra.mxu0 0.0
  %1315 = vmatprep.subr.mxu0 0.0
  %1316 = vmatpush1.msra.mxu0 0.0
  %1317 = vmatprep.subr.mxu0 0.0
  %1318 = vmatpush1.msra.mxu0 0.0
  %1319 = vmatprep.subr.mxu0 0.0
  %1320 = vmatpush1.msra.mxu0 0.0
  %1321 = vmatprep.subr.mxu0 0.0
  %1322 = vmatpush1.msra.mxu0 0.0
  %1323 = vmatprep.subr.mxu0 0.0
  %1324 = vmatpush1.msra.mxu0 0.0
  %1325 = vmatprep.subr.mxu0 0.0
  %1326 = vmatpush1.msra.mxu0 0.0
  %1327 = vmatprep.subr.mxu0 0.0
  %1328 = vmatpush1.msra.mxu0 0.0
  %1329 = vmatprep.subr.mxu0 0.0
  %1330 = vmatpush1.msra.mxu0 0.0
  %1331 = vmatprep.subr.mxu0 0.0
  %1332 = vmatpush1.msra.mxu0 0.0
  %1333 = vmatprep.subr.mxu0 0.0
  %1334 = vmatpush1.msra.mxu0 0.0
  %1335 = vmatprep.mubr.f32.mxu0 0.0
  %1336 = vmatmul.mubr.f32.gmra.mrb[0].mxu0 %v1197
  %v1337 = vpop.f32.mrb[0].mxu0
  %v1338 = vadd.f32 0.0, %v1337
  %v1339 = vpop.f32.mrb[0].mxu0
  %1340 = vdwg.mxu0
  %v1342 = vrot.slane %v1338, 3
  %v1343 = vrot.slane %v1338, 4
  %v1346 = vadd.f32 %v106, %v1342
  %v1347 = vadd.f32 %v111, %v1343
  %v1348 = vtanh.pop %v1346
  %v1349 = vtanh.pop %v1347
  %v1351 = vsel %vm118, %v1270, 0
  %1353 = vmatprep.subr.mxu0 0.0
  %1354 = vmatpush1.msra.mxu0 %v24
  %1355 = vmatprep.subr.mxu0 0.0
  %1356 = vmatpush1.msra.mxu0 0.0
  %1357 = vmatprep.subr.mxu0 0.0
  %1358 = vmatpush1.msra.mxu0 0.0
  %1359 = vmatprep.subr.mxu0 0.0
  %1360 = vmatpush1.msra.mxu0 0.0
  %1361 = vmatprep.subr.mxu0 0.0
  %1362 = vmatpush1.msra.mxu0 0.0
  %1363 = vmatprep.subr.mxu0 0.0
  %1364 = vmatpush1.msra.mxu0 0.0
  %1365 = vmatprep.subr.mxu0 0.0
  %1366 = vmatpush1.msra.mxu0 0.0
  %1367 = vmatprep.subr.mxu0 0.0
  %1368 = vmatpush1.msra.mxu0 0.0
  %1369 = vmatprep.subr.mxu0 0.0
  %1370 = vmatpush1.msra.mxu0 0.0
  %1371 = vmatprep.subr.mxu0 0.0
  %1372 = vmatpush1.msra.mxu0 0.0
  %1373 = vmatprep.subr.mxu0 0.0
  %1374 = vmatpush1.msra.mxu0 0.0
  %1375 = vmatprep.subr.mxu0 0.0
  %1376 = vmatpush1.msra.mxu0 0.0
  %1377 = vmatprep.subr.mxu0 0.0
  %1378 = vmatpush1.msra.mxu0 0.0
  %1379 = vmatprep.subr.mxu0 0.0
  %1380 = vmatpush1.msra.mxu0 0.0
  %1381 = vmatprep.subr.mxu0 0.0
  %1382 = vmatpush1.msra.mxu0 0.0
  %1383 = vmatprep.subr.mxu0 0.0
  %1384 = vmatpush1.msra.mxu0 0.0
  %1385 = vmatprep.subr.mxu0 0.0
  %1386 = vmatpush1.msra.mxu0 0.0
  %1387 = vmatprep.subr.mxu0 0.0
  %1388 = vmatpush1.msra.mxu0 0.0
  %1389 = vmatprep.subr.mxu0 0.0
  %1390 = vmatpush1.msra.mxu0 0.0
  %1391 = vmatprep.subr.mxu0 0.0
  %1392 = vmatpush1.msra.mxu0 0.0
  %1393 = vmatprep.subr.mxu0 0.0
  %1394 = vmatpush1.msra.mxu0 0.0
  %1395 = vmatprep.subr.mxu0 0.0
  %1396 = vmatpush1.msra.mxu0 0.0
  %1397 = vmatprep.subr.mxu0 0.0
  %1398 = vmatpush1.msra.mxu0 0.0
  %1399 = vmatprep.subr.mxu0 0.0
  %1400 = vmatpush1.msra.mxu0 0.0
  %1401 = vmatprep.subr.mxu0 0.0
  %1402 = vmatpush1.msra.mxu0 0.0
  %1403 = vmatprep.subr.mxu0 0.0
  %1404 = vmatpush1.msra.mxu0 0.0
  %1405 = vmatprep.subr.mxu0 0.0
  %1406 = vmatpush1.msra.mxu0 0.0
  %1407 = vmatprep.subr.mxu0 0.0
  %1408 = vmatpush1.msra.mxu0 0.0
  %1409 = vmatprep.subr.mxu0 0.0
  %1410 = vmatpush1.msra.mxu0 0.0
  %1411 = vmatprep.subr.mxu0 0.0
  %1412 = vmatpush1.msra.mxu0 0.0
  %1413 = vmatprep.subr.mxu0 0.0
  %1414 = vmatpush1.msra.mxu0 0.0
  %1415 = vmatprep.subr.mxu0 0.0
  %1416 = vmatpush1.msra.mxu0 0.0
  %1417 = vmatprep.mubr.f32.mxu0 0.0
  %1418 = vmatmul.mubr.f32.gmra.mrb[0].mxu0 %v1351
  %v1419 = vpop.f32.mrb[0].mxu0
  %v1420 = vadd.f32 0.0, %v1419
  %v1421 = vpop.f32.mrb[0].mxu0
  %1422 = vdwg.mxu0
  %v1425 = vrot.slane %v1348, 5
  %v1426 = vrot.slane %v1349, 4
  %v1427 = vsel %vm273, %v1426, %v1425
  %v1428 = vsel %vm118, %v1427, 0
  %1430 = vmatprep.subr.mxu0 0.0
  %1431 = vmatpush1.msra.mxu0 %v23
  %1432 = vmatprep.subr.mxu0 0.0
  %1433 = vmatpush1.msra.mxu0 0.0
  %1434 = vmatprep.subr.mxu0 0.0
  %1435 = vmatpush1.msra.mxu0 0.0
  %1436 = vmatprep.subr.mxu0 0.0
  %1437 = vmatpush1.msra.mxu0 0.0
  %1438 = vmatprep.subr.mxu0 0.0
  %1439 = vmatpush1.msra.mxu0 0.0
  %1440 = vmatprep.subr.mxu0 0.0
  %1441 = vmatpush1.msra.mxu0 0.0
  %1442 = vmatprep.subr.mxu0 0.0
  %1443 = vmatpush1.msra.mxu0 0.0
  %1444 = vmatprep.subr.mxu0 0.0
  %1445 = vmatpush1.msra.mxu0 0.0
  %1446 = vmatprep.subr.mxu0 0.0
  %1447 = vmatpush1.msra.mxu0 0.0
  %1448 = vmatprep.subr.mxu0 0.0
  %1449 = vmatpush1.msra.mxu0 0.0
  %1450 = vmatprep.subr.mxu0 0.0
  %1451 = vmatpush1.msra.mxu0 0.0
  %1452 = vmatprep.subr.mxu0 0.0
  %1453 = vmatpush1.msra.mxu0 0.0
  %1454 = vmatprep.subr.mxu0 0.0
  %1455 = vmatpush1.msra.mxu0 0.0
  %1456 = vmatprep.subr.mxu0 0.0
  %1457 = vmatpush1.msra.mxu0 0.0
  %1458 = vmatprep.subr.mxu0 0.0
  %1459 = vmatpush1.msra.mxu0 0.0
  %1460 = vmatprep.subr.mxu0 0.0
  %1461 = vmatpush1.msra.mxu0 0.0
  %1462 = vmatprep.subr.mxu0 0.0
  %1463 = vmatpush1.msra.mxu0 0.0
  %1464 = vmatprep.subr.mxu0 0.0
  %1465 = vmatpush1.msra.mxu0 0.0
  %1466 = vmatprep.subr.mxu0 0.0
  %1467 = vmatpush1.msra.mxu0 0.0
  %1468 = vmatprep.subr.mxu0 0.0
  %1469 = vmatpush1.msra.mxu0 0.0
  %1470 = vmatprep.subr.mxu0 0.0
  %1471 = vmatpush1.msra.mxu0 0.0
  %1472 = vmatprep.subr.mxu0 0.0
  %1473 = vmatpush1.msra.mxu0 0.0
  %1474 = vmatprep.subr.mxu0 0.0
  %1475 = vmatpush1.msra.mxu0 0.0
  %1476 = vmatprep.subr.mxu0 0.0
  %1477 = vmatpush1.msra.mxu0 0.0
  %1478 = vmatprep.subr.mxu0 0.0
  %1479 = vmatpush1.msra.mxu0 0.0
  %1480 = vmatprep.subr.mxu0 0.0
  %1481 = vmatpush1.msra.mxu0 0.0
  %1482 = vmatprep.subr.mxu0 0.0
  %1483 = vmatpush1.msra.mxu0 0.0
  %1484 = vmatprep.subr.mxu0 0.0
  %1485 = vmatpush1.msra.mxu0 0.0
  %1486 = vmatprep.subr.mxu0 0.0
  %1487 = vmatpush1.msra.mxu0 0.0
  %1488 = vmatprep.subr.mxu0 0.0
  %1489 = vmatpush1.msra.mxu0 0.0
  %1490 = vmatprep.subr.mxu0 0.0
  %1491 = vmatpush1.msra.mxu0 0.0
  %1492 = vmatprep.subr.mxu0 0.0
  %1493 = vmatpush1.msra.mxu0 0.0
  %1494 = vmatprep.mubr.f32.mxu0 0.0
  %1495 = vmatmul.mubr.f32.gmra.mrb[0].mxu0 %v1428
  %v1496 = vpop.f32.mrb[0].mxu0
  %v1497 = vadd.f32 %v1420, %v1496
  %v1498 = vpop.f32.mrb[0].mxu0
  %1499 = vdwg.mxu0
  %v1500 = vadd.f32 %v1497, %v117
  %v1501 = vtanh.pop %v1500
  %1502 = vmatprep.subr.mxu0 0.0
  %1503 = vmatpush1.msra.mxu0 %v21
  %1504 = vmatprep.subr.mxu0 0.0
  %1505 = vmatpush1.msra.mxu0 0.0
  %1506 = vmatprep.subr.mxu0 0.0
  %1507 = vmatpush1.msra.mxu0 0.0
  %1508 = vmatprep.subr.mxu0 0.0
  %1509 = vmatpush1.msra.mxu0 0.0
  %1510 = vmatprep.subr.mxu0 0.0
  %1511 = vmatpush1.msra.mxu0 0.0
  %1512 = vmatprep.subr.mxu0 0.0
  %1513 = vmatpush1.msra.mxu0 0.0
  %1514 = vmatprep.subr.mxu0 0.0
  %1515 = vmatpush1.msra.mxu0 0.0
  %1516 = vmatprep.subr.mxu0 0.0
  %1517 = vmatpush1.msra.mxu0 0.0
  %1518 = vmatprep.subr.mxu0 0.0
  %1519 = vmatpush1.msra.mxu0 0.0
  %1520 = vmatprep.subr.mxu0 0.0
  %1521 = vmatpush1.msra.mxu0 0.0
  %1522 = vmatprep.subr.mxu0 0.0
  %1523 = vmatpush1.msra.mxu0 0.0
  %1524 = vmatprep.subr.mxu0 0.0
  %1525 = vmatpush1.msra.mxu0 0.0
  %1526 = vmatprep.subr.mxu0 0.0
  %1527 = vmatpush1.msra.mxu0 0.0
  %1528 = vmatprep.subr.mxu0 0.0
  %1529 = vmatpush1.msra.mxu0 0.0
  %1530 = vmatprep.subr.mxu0 0.0
  %1531 = vmatpush1.msra.mxu0 0.0
  %1532 = vmatprep.subr.mxu0 0.0
  %1533 = vmatpush1.msra.mxu0 0.0
  %1534 = vmatprep.subr.mxu0 0.0
  %1535 = vmatpush1.msra.mxu0 0.0
  %1536 = vmatprep.subr.mxu0 0.0
  %1537 = vmatpush1.msra.mxu0 0.0
  %1538 = vmatprep.subr.mxu0 0.0
  %1539 = vmatpush1.msra.mxu0 0.0
  %1540 = vmatprep.subr.mxu0 0.0
  %1541 = vmatpush1.msra.mxu0 0.0
  %1542 = vmatprep.subr.mxu0 0.0
  %1543 = vmatpush1.msra.mxu0 0.0
  %1544 = vmatprep.subr.mxu0 0.0
  %1545 = vmatpush1.msra.mxu0 0.0
  %1546 = vmatprep.subr.mxu0 0.0
  %1547 = vmatpush1.msra.mxu0 0.0
  %1548 = vmatprep.subr.mxu0 0.0
  %1549 = vmatpush1.msra.mxu0 0.0
  %1550 = vmatprep.subr.mxu0 0.0
  %1551 = vmatpush1.msra.mxu0 0.0
  %1552 = vmatprep.subr.mxu0 0.0
  %1553 = vmatpush1.msra.mxu0 0.0
  %1554 = vmatprep.subr.mxu0 0.0
  %1555 = vmatpush1.msra.mxu0 0.0
  %1556 = vmatprep.subr.mxu0 0.0
  %1557 = vmatpush1.msra.mxu0 0.0
  %1558 = vmatprep.subr.mxu0 0.0
  %1559 = vmatpush1.msra.mxu0 0.0
  %1560 = vmatprep.subr.mxu0 0.0
  %1561 = vmatpush1.msra.mxu0 0.0
  %1562 = vmatprep.subr.mxu0 0.0
  %1563 = vmatpush1.msra.mxu0 0.0
  %1564 = vmatprep.subr.mxu0 0.0
  %1565 = vmatpush1.msra.mxu0 0.0
  %1566 = vmatprep.mubr.f32.mxu0 0.0
  %1567 = vmatmul.mubr.f32.gmra.mrb[0].mxu0 %v1428
  %v1568 = vpop.f32.mrb[0].mxu0
  %v1569 = vadd.f32 0.0, %v1568
  %v1570 = vpop.f32.mrb[0].mxu0
  %1571 = vdwg.mxu0
  %v1573 = vrot.slane %v1569, 2
  %v1574 = vrot.slane %v1569, 3
  %v1577 = vadd.f32 %v106, %v1573
  %v1578 = vadd.f32 %v111, %v1574
  %v1579 = vtanh.pop %v1577
  %v1580 = vtanh.pop %v1578
  %v1582 = vsel %vm118, %v1501, 0
  %1584 = vmatprep.subr.mxu0 0.0
  %1585 = vmatpush1.msra.mxu0 %v24
  %1586 = vmatprep.subr.mxu0 0.0
  %1587 = vmatpush1.msra.mxu0 0.0
  %1588 = vmatprep.subr.mxu0 0.0
  %1589 = vmatpush1.msra.mxu0 0.0
  %1590 = vmatprep.subr.mxu0 0.0
  %1591 = vmatpush1.msra.mxu0 0.0
  %1592 = vmatprep.subr.mxu0 0.0
  %1593 = vmatpush1.msra.mxu0 0.0
  %1594 = vmatprep.subr.mxu0 0.0
  %1595 = vmatpush1.msra.mxu0 0.0
  %1596 = vmatprep.subr.mxu0 0.0
  %1597 = vmatpush1.msra.mxu0 0.0
  %1598 = vmatprep.subr.mxu0 0.0
  %1599 = vmatpush1.msra.mxu0 0.0
  %1600 = vmatprep.subr.mxu0 0.0
  %1601 = vmatpush1.msra.mxu0 0.0
  %1602 = vmatprep.subr.mxu0 0.0
  %1603 = vmatpush1.msra.mxu0 0.0
  %1604 = vmatprep.subr.mxu0 0.0
  %1605 = vmatpush1.msra.mxu0 0.0
  %1606 = vmatprep.subr.mxu0 0.0
  %1607 = vmatpush1.msra.mxu0 0.0
  %1608 = vmatprep.subr.mxu0 0.0
  %1609 = vmatpush1.msra.mxu0 0.0
  %1610 = vmatprep.subr.mxu0 0.0
  %1611 = vmatpush1.msra.mxu0 0.0
  %1612 = vmatprep.subr.mxu0 0.0
  %1613 = vmatpush1.msra.mxu0 0.0
  %1614 = vmatprep.subr.mxu0 0.0
  %1615 = vmatpush1.msra.mxu0 0.0
  %1616 = vmatprep.subr.mxu0 0.0
  %1617 = vmatpush1.msra.mxu0 0.0
  %1618 = vmatprep.subr.mxu0 0.0
  %1619 = vmatpush1.msra.mxu0 0.0
  %1620 = vmatprep.subr.mxu0 0.0
  %1621 = vmatpush1.msra.mxu0 0.0
  %1622 = vmatprep.subr.mxu0 0.0
  %1623 = vmatpush1.msra.mxu0 0.0
  %1624 = vmatprep.subr.mxu0 0.0
  %1625 = vmatpush1.msra.mxu0 0.0
  %1626 = vmatprep.subr.mxu0 0.0
  %1627 = vmatpush1.msra.mxu0 0.0
  %1628 = vmatprep.subr.mxu0 0.0
  %1629 = vmatpush1.msra.mxu0 0.0
  %1630 = vmatprep.subr.mxu0 0.0
  %1631 = vmatpush1.msra.mxu0 0.0
  %1632 = vmatprep.subr.mxu0 0.0
  %1633 = vmatpush1.msra.mxu0 0.0
  %1634 = vmatprep.subr.mxu0 0.0
  %1635 = vmatpush1.msra.mxu0 0.0
  %1636 = vmatprep.subr.mxu0 0.0
  %1637 = vmatpush1.msra.mxu0 0.0
  %1638 = vmatprep.subr.mxu0 0.0
  %1639 = vmatpush1.msra.mxu0 0.0
  %1640 = vmatprep.subr.mxu0 0.0
  %1641 = vmatpush1.msra.mxu0 0.0
  %1642 = vmatprep.subr.mxu0 0.0
  %1643 = vmatpush1.msra.mxu0 0.0
  %1644 = vmatprep.subr.mxu0 0.0
  %1645 = vmatpush1.msra.mxu0 0.0
  %1646 = vmatprep.subr.mxu0 0.0
  %1647 = vmatpush1.msra.mxu0 0.0
  %1648 = vmatprep.mubr.f32.mxu0 0.0
  %1649 = vmatmul.mubr.f32.gmra.mrb[0].mxu0 %v1582
  %v1650 = vpop.f32.mrb[0].mxu0
  %v1651 = vadd.f32 0.0, %v1650
  %v1652 = vpop.f32.mrb[0].mxu0
  %1653 = vdwg.mxu0
  %v1656 = vrot.slane %v1579, 6
  %v1657 = vrot.slane %v1580, 5
  %v1658 = vsel %vm273, %v1657, %v1656
  %v1659 = vsel %vm118, %v1658, 0
  %1661 = vmatprep.subr.mxu0 0.0
  %1662 = vmatpush1.msra.mxu0 %v23
  %1663 = vmatprep.subr.mxu0 0.0
  %1664 = vmatpush1.msra.mxu0 0.0
  %1665 = vmatprep.subr.mxu0 0.0
  %1666 = vmatpush1.msra.mxu0 0.0
  %1667 = vmatprep.subr.mxu0 0.0
  %1668 = vmatpush1.msra.mxu0 0.0
  %1669 = vmatprep.subr.mxu0 0.0
  %1670 = vmatpush1.msra.mxu0 0.0
  %1671 = vmatprep.subr.mxu0 0.0
  %1672 = vmatpush1.msra.mxu0 0.0
  %1673 = vmatprep.subr.mxu0 0.0
  %1674 = vmatpush1.msra.mxu0 0.0
  %1675 = vmatprep.subr.mxu0 0.0
  %1676 = vmatpush1.msra.mxu0 0.0
  %1677 = vmatprep.subr.mxu0 0.0
  %1678 = vmatpush1.msra.mxu0 0.0
  %1679 = vmatprep.subr.mxu0 0.0
  %1680 = vmatpush1.msra.mxu0 0.0
  %1681 = vmatprep.subr.mxu0 0.0
  %1682 = vmatpush1.msra.mxu0 0.0
  %1683 = vmatprep.subr.mxu0 0.0
  %1684 = vmatpush1.msra.mxu0 0.0
  %1685 = vmatprep.subr.mxu0 0.0
  %1686 = vmatpush1.msra.mxu0 0.0
  %1687 = vmatprep.subr.mxu0 0.0
  %1688 = vmatpush1.msra.mxu0 0.0
  %1689 = vmatprep.subr.mxu0 0.0
  %1690 = vmatpush1.msra.mxu0 0.0
  %1691 = vmatprep.subr.mxu0 0.0
  %1692 = vmatpush1.msra.mxu0 0.0
  %1693 = vmatprep.subr.mxu0 0.0
  %1694 = vmatpush1.msra.mxu0 0.0
  %1695 = vmatprep.subr.mxu0 0.0
  %1696 = vmatpush1.msra.mxu0 0.0
  %1697 = vmatprep.subr.mxu0 0.0
  %1698 = vmatpush1.msra.mxu0 0.0
  %1699 = vmatprep.subr.mxu0 0.0
  %1700 = vmatpush1.msra.mxu0 0.0
  %1701 = vmatprep.subr.mxu0 0.0
  %1702 = vmatpush1.msra.mxu0 0.0
  %1703 = vmatprep.subr.mxu0 0.0
  %1704 = vmatpush1.msra.mxu0 0.0
  %1705 = vmatprep.subr.mxu0 0.0
  %1706 = vmatpush1.msra.mxu0 0.0
  %1707 = vmatprep.subr.mxu0 0.0
  %1708 = vmatpush1.msra.mxu0 0.0
  %1709 = vmatprep.subr.mxu0 0.0
  %1710 = vmatpush1.msra.mxu0 0.0
  %1711 = vmatprep.subr.mxu0 0.0
  %1712 = vmatpush1.msra.mxu0 0.0
  %1713 = vmatprep.subr.mxu0 0.0
  %1714 = vmatpush1.msra.mxu0 0.0
  %1715 = vmatprep.subr.mxu0 0.0
  %1716 = vmatpush1.msra.mxu0 0.0
  %1717 = vmatprep.subr.mxu0 0.0
  %1718 = vmatpush1.msra.mxu0 0.0
  %1719 = vmatprep.subr.mxu0 0.0
  %1720 = vmatpush1.msra.mxu0 0.0
  %1721 = vmatprep.subr.mxu0 0.0
  %1722 = vmatpush1.msra.mxu0 0.0
  %1723 = vmatprep.subr.mxu0 0.0
  %1724 = vmatpush1.msra.mxu0 0.0
  %1725 = vmatprep.mubr.f32.mxu0 0.0
  %1726 = vmatmul.mubr.f32.gmra.mrb[0].mxu0 %v1659
  %v1727 = vpop.f32.mrb[0].mxu0
  %v1728 = vadd.f32 %v1651, %v1727
  %v1729 = vpop.f32.mrb[0].mxu0
  %1730 = vdwg.mxu0
  %v1731 = vadd.f32 %v1728, %v117
  %v1732 = vtanh.pop %v1731
  %1733 = vmatprep.subr.mxu0 0.0
  %1734 = vmatpush1.msra.mxu0 %v21
  %1735 = vmatprep.subr.mxu0 0.0
  %1736 = vmatpush1.msra.mxu0 0.0
  %1737 = vmatprep.subr.mxu0 0.0
  %1738 = vmatpush1.msra.mxu0 0.0
  %1739 = vmatprep.subr.mxu0 0.0
  %1740 = vmatpush1.msra.mxu0 0.0
  %1741 = vmatprep.subr.mxu0 0.0
  %1742 = vmatpush1.msra.mxu0 0.0
  %1743 = vmatprep.subr.mxu0 0.0
  %1744 = vmatpush1.msra.mxu0 0.0
  %1745 = vmatprep.subr.mxu0 0.0
  %1746 = vmatpush1.msra.mxu0 0.0
  %1747 = vmatprep.subr.mxu0 0.0
  %1748 = vmatpush1.msra.mxu0 0.0
  %1749 = vmatprep.subr.mxu0 0.0
  %1750 = vmatpush1.msra.mxu0 0.0
  %1751 = vmatprep.subr.mxu0 0.0
  %1752 = vmatpush1.msra.mxu0 0.0
  %1753 = vmatprep.subr.mxu0 0.0
  %1754 = vmatpush1.msra.mxu0 0.0
  %1755 = vmatprep.subr.mxu0 0.0
  %1756 = vmatpush1.msra.mxu0 0.0
  %1757 = vmatprep.subr.mxu0 0.0
  %1758 = vmatpush1.msra.mxu0 0.0
  %1759 = vmatprep.subr.mxu0 0.0
  %1760 = vmatpush1.msra.mxu0 0.0
  %1761 = vmatprep.subr.mxu0 0.0
  %1762 = vmatpush1.msra.mxu0 0.0
  %1763 = vmatprep.subr.mxu0 0.0
  %1764 = vmatpush1.msra.mxu0 0.0
  %1765 = vmatprep.subr.mxu0 0.0
  %1766 = vmatpush1.msra.mxu0 0.0
  %1767 = vmatprep.subr.mxu0 0.0
  %1768 = vmatpush1.msra.mxu0 0.0
  %1769 = vmatprep.subr.mxu0 0.0
  %1770 = vmatpush1.msra.mxu0 0.0
  %1771 = vmatprep.subr.mxu0 0.0
  %1772 = vmatpush1.msra.mxu0 0.0
  %1773 = vmatprep.subr.mxu0 0.0
  %1774 = vmatpush1.msra.mxu0 0.0
  %1775 = vmatprep.subr.mxu0 0.0
  %1776 = vmatpush1.msra.mxu0 0.0
  %1777 = vmatprep.subr.mxu0 0.0
  %1778 = vmatpush1.msra.mxu0 0.0
  %1779 = vmatprep.subr.mxu0 0.0
  %1780 = vmatpush1.msra.mxu0 0.0
  %1781 = vmatprep.subr.mxu0 0.0
  %1782 = vmatpush1.msra.mxu0 0.0
  %1783 = vmatprep.subr.mxu0 0.0
  %1784 = vmatpush1.msra.mxu0 0.0
  %1785 = vmatprep.subr.mxu0 0.0
  %1786 = vmatpush1.msra.mxu0 0.0
  %1787 = vmatprep.subr.mxu0 0.0
  %1788 = vmatpush1.msra.mxu0 0.0
  %1789 = vmatprep.subr.mxu0 0.0
  %1790 = vmatpush1.msra.mxu0 0.0
  %1791 = vmatprep.subr.mxu0 0.0
  %1792 = vmatpush1.msra.mxu0 0.0
  %1793 = vmatprep.subr.mxu0 0.0
  %1794 = vmatpush1.msra.mxu0 0.0
  %1795 = vmatprep.subr.mxu0 0.0
  %1796 = vmatpush1.msra.mxu0 0.0
  %1797 = vmatprep.mubr.f32.mxu0 0.0
  %1798 = vmatmul.mubr.f32.gmra.mrb[0].mxu0 %v1659
  %v1799 = vpop.f32.mrb[0].mxu0
  %v1800 = vadd.f32 0.0, %v1799
  %v1801 = vpop.f32.mrb[0].mxu0
  %1802 = vdwg.mxu0
  %v1804 = vrot.slane %v1800, 1
  %v1805 = vrot.slane %v1800, 2
  %v1808 = vadd.f32 %v106, %v1804
  %v1809 = vadd.f32 %v111, %v1805
  %v1810 = vtanh.pop %v1808
  %v1811 = vtanh.pop %v1809
  %v1813 = vsel %vm118, %v1732, 0
  %1815 = vmatprep.subr.mxu0 0.0
  %1816 = vmatpush1.msra.mxu0 %v24
  %1817 = vmatprep.subr.mxu0 0.0
  %1818 = vmatpush1.msra.mxu0 0.0
  %1819 = vmatprep.subr.mxu0 0.0
  %1820 = vmatpush1.msra.mxu0 0.0
  %1821 = vmatprep.subr.mxu0 0.0
  %1822 = vmatpush1.msra.mxu0 0.0
  %1823 = vmatprep.subr.mxu0 0.0
  %1824 = vmatpush1.msra.mxu0 0.0
  %1825 = vmatprep.subr.mxu0 0.0
  %1826 = vmatpush1.msra.mxu0 0.0
  %1827 = vmatprep.subr.mxu0 0.0
  %1828 = vmatpush1.msra.mxu0 0.0
  %1829 = vmatprep.subr.mxu0 0.0
  %1830 = vmatpush1.msra.mxu0 0.0
  %1831 = vmatprep.subr.mxu0 0.0
  %1832 = vmatpush1.msra.mxu0 0.0
  %1833 = vmatprep.subr.mxu0 0.0
  %1834 = vmatpush1.msra.mxu0 0.0
  %1835 = vmatprep.subr.mxu0 0.0
  %1836 = vmatpush1.msra.mxu0 0.0
  %1837 = vmatprep.subr.mxu0 0.0
  %1838 = vmatpush1.msra.mxu0 0.0
  %1839 = vmatprep.subr.mxu0 0.0
  %1840 = vmatpush1.msra.mxu0 0.0
  %1841 = vmatprep.subr.mxu0 0.0
  %1842 = vmatpush1.msra.mxu0 0.0
  %1843 = vmatprep.subr.mxu0 0.0
  %1844 = vmatpush1.msra.mxu0 0.0
  %1845 = vmatprep.subr.mxu0 0.0
  %1846 = vmatpush1.msra.mxu0 0.0
  %1847 = vmatprep.subr.mxu0 0.0
  %1848 = vmatpush1.msra.mxu0 0.0
  %1849 = vmatprep.subr.mxu0 0.0
  %1850 = vmatpush1.msra.mxu0 0.0
  %1851 = vmatprep.subr.mxu0 0.0
  %1852 = vmatpush1.msra.mxu0 0.0
  %1853 = vmatprep.subr.mxu0 0.0
  %1854 = vmatpush1.msra.mxu0 0.0
  %1855 = vmatprep.subr.mxu0 0.0
  %1856 = vmatpush1.msra.mxu0 0.0
  %1857 = vmatprep.subr.mxu0 0.0
  %1858 = vmatpush1.msra.mxu0 0.0
  %1859 = vmatprep.subr.mxu0 0.0
  %1860 = vmatpush1.msra.mxu0 0.0
  %1861 = vmatprep.subr.mxu0 0.0
  %1862 = vmatpush1.msra.mxu0 0.0
  %1863 = vmatprep.subr.mxu0 0.0
  %1864 = vmatpush1.msra.mxu0 0.0
  %1865 = vmatprep.subr.mxu0 0.0
  %1866 = vmatpush1.msra.mxu0 0.0
  %1867 = vmatprep.subr.mxu0 0.0
  %1868 = vmatpush1.msra.mxu0 0.0
  %1869 = vmatprep.subr.mxu0 0.0
  %1870 = vmatpush1.msra.mxu0 0.0
  %1871 = vmatprep.subr.mxu0 0.0
  %1872 = vmatpush1.msra.mxu0 0.0
  %1873 = vmatprep.subr.mxu0 0.0
  %1874 = vmatpush1.msra.mxu0 0.0
  %1875 = vmatprep.subr.mxu0 0.0
  %1876 = vmatpush1.msra.mxu0 0.0
  %1877 = vmatprep.subr.mxu0 0.0
  %1878 = vmatpush1.msra.mxu0 0.0
  %1879 = vmatprep.mubr.f32.mxu0 0.0
  %1880 = vmatmul.mubr.f32.gmra.mrb[0].mxu0 %v1813
  %v1881 = vpop.f32.mrb[0].mxu0
  %v1882 = vadd.f32 0.0, %v1881
  %v1883 = vpop.f32.mrb[0].mxu0
  %1884 = vdwg.mxu0
  %v1887 = vrot.slane %v1810, 7
  %v1888 = vrot.slane %v1811, 6
  %v1889 = vsel %vm273, %v1888, %v1887
  %v1890 = vsel %vm118, %v1889, 0
  %1892 = vmatprep.subr.mxu0 0.0
  %1893 = vmatpush1.msra.mxu0 %v23
  %1894 = vmatprep.subr.mxu0 0.0
  %1895 = vmatpush1.msra.mxu0 0.0
  %1896 = vmatprep.subr.mxu0 0.0
  %1897 = vmatpush1.msra.mxu0 0.0
  %1898 = vmatprep.subr.mxu0 0.0
  %1899 = vmatpush1.msra.mxu0 0.0
  %1900 = vmatprep.subr.mxu0 0.0
  %1901 = vmatpush1.msra.mxu0 0.0
  %1902 = vmatprep.subr.mxu0 0.0
  %1903 = vmatpush1.msra.mxu0 0.0
  %1904 = vmatprep.subr.mxu0 0.0
  %1905 = vmatpush1.msra.mxu0 0.0
  %1906 = vmatprep.subr.mxu0 0.0
  %1907 = vmatpush1.msra.mxu0 0.0
  %1908 = vmatprep.subr.mxu0 0.0
  %1909 = vmatpush1.msra.mxu0 0.0
  %1910 = vmatprep.subr.mxu0 0.0
  %1911 = vmatpush1.msra.mxu0 0.0
  %1912 = vmatprep.subr.mxu0 0.0
  %1913 = vmatpush1.msra.mxu0 0.0
  %1914 = vmatprep.subr.mxu0 0.0
  %1915 = vmatpush1.msra.mxu0 0.0
  %1916 = vmatprep.subr.mxu0 0.0
  %1917 = vmatpush1.msra.mxu0 0.0
  %1918 = vmatprep.subr.mxu0 0.0
  %1919 = vmatpush1.msra.mxu0 0.0
  %1920 = vmatprep.subr.mxu0 0.0
  %1921 = vmatpush1.msra.mxu0 0.0
  %1922 = vmatprep.subr.mxu0 0.0
  %1923 = vmatpush1.msra.mxu0 0.0
  %1924 = vmatprep.subr.mxu0 0.0
  %1925 = vmatpush1.msra.mxu0 0.0
  %1926 = vmatprep.subr.mxu0 0.0
  %1927 = vmatpush1.msra.mxu0 0.0
  %1928 = vmatprep.subr.mxu0 0.0
  %1929 = vmatpush1.msra.mxu0 0.0
  %1930 = vmatprep.subr.mxu0 0.0
  %1931 = vmatpush1.msra.mxu0 0.0
  %1932 = vmatprep.subr.mxu0 0.0
  %1933 = vmatpush1.msra.mxu0 0.0
  %1934 = vmatprep.subr.mxu0 0.0
  %1935 = vmatpush1.msra.mxu0 0.0
  %1936 = vmatprep.subr.mxu0 0.0
  %1937 = vmatpush1.msra.mxu0 0.0
  %1938 = vmatprep.subr.mxu0 0.0
  %1939 = vmatpush1.msra.mxu0 0.0
  %1940 = vmatprep.subr.mxu0 0.0
  %1941 = vmatpush1.msra.mxu0 0.0
  %1942 = vmatprep.subr.mxu0 0.0
  %1943 = vmatpush1.msra.mxu0 0.0
  %1944 = vmatprep.subr.mxu0 0.0
  %1945 = vmatpush1.msra.mxu0 0.0
  %1946 = vmatprep.subr.mxu0 0.0
  %1947 = vmatpush1.msra.mxu0 0.0
  %1948 = vmatprep.subr.mxu0 0.0
  %1949 = vmatpush1.msra.mxu0 0.0
  %1950 = vmatprep.subr.mxu0 0.0
  %1951 = vmatpush1.msra.mxu0 0.0
  %1952 = vmatprep.subr.mxu0 0.0
  %1953 = vmatpush1.msra.mxu0 0.0
  %1954 = vmatprep.subr.mxu0 0.0
  %1955 = vmatpush1.msra.mxu0 0.0
  %1956 = vmatprep.mubr.f32.mxu0 0.0
  %1957 = vmatmul.mubr.f32.gmra.mrb[0].mxu0 %v1890
  %v1958 = vpop.f32.mrb[0].mxu0
  %v1959 = vadd.f32 %v1882, %v1958
  %v1960 = vpop.f32.mrb[0].mxu0
  %1961 = vdwg.mxu0
  %v1962 = vadd.f32 %v1959, %v117
  %v1963 = vtanh.pop %v1962
  %v1965 = vunpack.c.l.s4 1966171168
  %v1966 = vunpack.c.0.s8 %v1965
  %v1967 = vlaneseq
  %v1968 = vshrl.u32 %v1967, 7
  %v1969 = vsub.s32 %v1966, %v1968
  %v1970 = vrot.slane %v348, %v1969
  %v1971 = vcombine.high %v1970, %v1970
  %v1973 = vunpack.c.l.s4 1966171168
  %v1974 = vunpack.c.0.s8 %v1973
  %v1975 = vlaneseq
  %v1976 = vshrl.u32 %v1975, 7
  %v1977 = vsub.s32 %v1974, %v1976
  %v1978 = vrot.slane %v1970, %v1977
  %v1980 = vunpack.c.l.s4 1966171168
  %v1981 = vunpack.c.0.s8 %v1980
  %v1982 = vlaneseq
  %v1983 = vshrl.u32 %v1982, 7
  %v1984 = vsub.s32 %v1981, %v1983
  %v1985 = vrot.slane %v1971, %v1984
  %v1989 = vunpack.c.l.s4 1966171168
  %v1990 = vunpack.c.0.s8 %v1989
  %v1991 = vlaneseq
  %v1992 = vshrl.u32 %v1991, 7
  %v1993 = vsub.s32 %v1990, %v1992
  %v1994 = vrot.slane %v577, %v1993
  %v1995 = vcombine.high %v1994, %v1994
  %v1997 = vunpack.c.l.s4 1966171168
  %v1998 = vunpack.c.0.s8 %v1997
  %v1999 = vlaneseq
  %v2000 = vshrl.u32 %v1999, 7
  %v2001 = vsub.s32 %v1998, %v2000
  %v2002 = vrot.slane %v1994, %v2001
  %v2004 = vunpack.c.l.s4 1966171168
  %v2005 = vunpack.c.0.s8 %v2004
  %v2006 = vlaneseq
  %v2007 = vshrl.u32 %v2006, 7
  %v2008 = vsub.s32 %v2005, %v2007
  %v2009 = vrot.slane %v1995, %v2008
  %v2011 = vunpack.c.l.s4 1966171168
  %v2012 = vunpack.c.0.s8 %v2011
  %v2013 = vlaneseq
  %v2014 = vshrl.u32 %v2013, 7
  %v2015 = vsub.s32 %v2012, %v2014
  %v2016 = vrot.slane %v808, %v2015
  %v2017 = vcombine.high %v2016, %v2016
  %v2019 = vunpack.c.l.s4 1966171168
  %v2020 = vunpack.c.0.s8 %v2019
  %v2021 = vlaneseq
  %v2022 = vshrl.u32 %v2021, 7
  %v2023 = vsub.s32 %v2020, %v2022
  %v2024 = vrot.slane %v2016, %v2023
  %v2026 = vunpack.c.l.s4 1966171168
  %v2027 = vunpack.c.0.s8 %v2026
  %v2028 = vlaneseq
  %v2029 = vshrl.u32 %v2028, 7
  %v2030 = vsub.s32 %v2027, %v2029
  %v2031 = vrot.slane %v2017, %v2030
  %v2033 = vunpack.c.l.s4 1966171168
  %v2034 = vunpack.c.0.s8 %v2033
  %v2035 = vlaneseq
  %v2036 = vshrl.u32 %v2035, 7
  %v2037 = vsub.s32 %v2034, %v2036
  %v2038 = vrot.slane %v1039, %v2037
  %v2039 = vcombine.high %v2038, %v2038
  %v2041 = vunpack.c.l.s4 1966171168
  %v2042 = vunpack.c.0.s8 %v2041
  %v2043 = vlaneseq
  %v2044 = vshrl.u32 %v2043, 7
  %v2045 = vsub.s32 %v2042, %v2044
  %v2046 = vrot.slane %v2038, %v2045
  %v2048 = vunpack.c.l.s4 1966171168
  %v2049 = vunpack.c.0.s8 %v2048
  %v2050 = vlaneseq
  %v2051 = vshrl.u32 %v2050, 7
  %v2052 = vsub.s32 %v2049, %v2051
  %v2053 = vrot.slane %v2039, %v2052
  %v2055 = vunpack.c.l.s4 1966171168
  %v2056 = vunpack.c.0.s8 %v2055
  %v2057 = vlaneseq
  %v2058 = vshrl.u32 %v2057, 7
  %v2059 = vsub.s32 %v2056, %v2058
  %v2060 = vrot.slane %v1270, %v2059
  %v2061 = vcombine.high %v2060, %v2060
  %v2063 = vunpack.c.l.s4 1966171168
  %v2064 = vunpack.c.0.s8 %v2063
  %v2065 = vlaneseq
  %v2066 = vshrl.u32 %v2065, 7
  %v2067 = vsub.s32 %v2064, %v2066
  %v2068 = vrot.slane %v2060, %v2067
  %v2070 = vunpack.c.l.s4 1966171168
  %v2071 = vunpack.c.0.s8 %v2070
  %v2072 = vlaneseq
  %v2073 = vshrl.u32 %v2072, 7
  %v2074 = vsub.s32 %v2071, %v2073
  %v2075 = vrot.slane %v2061, %v2074
  %v2077 = vunpack.c.l.s4 1966171168
  %v2078 = vunpack.c.0.s8 %v2077
  %v2079 = vlaneseq
  %v2080 = vshrl.u32 %v2079, 7
  %v2081 = vsub.s32 %v2078, %v2080
  %v2082 = vrot.slane %v1501, %v2081
  %v2083 = vcombine.high %v2082, %v2082
  %v2085 = vunpack.c.l.s4 1966171168
  %v2086 = vunpack.c.0.s8 %v2085
  %v2087 = vlaneseq
  %v2088 = vshrl.u32 %v2087, 7
  %v2089 = vsub.s32 %v2086, %v2088
  %v2090 = vrot.slane %v2082, %v2089
  %v2092 = vunpack.c.l.s4 1966171168
  %v2093 = vunpack.c.0.s8 %v2092
  %v2094 = vlaneseq
  %v2095 = vshrl.u32 %v2094, 7
  %v2096 = vsub.s32 %v2093, %v2095
  %v2097 = vrot.slane %v2083, %v2096
  %v2099 = vunpack.c.l.s4 1966171168
  %v2100 = vunpack.c.0.s8 %v2099
  %v2101 = vlaneseq
  %v2102 = vshrl.u32 %v2101, 7
  %v2103 = vsub.s32 %v2100, %v2102
  %v2104 = vrot.slane %v1732, %v2103
  %v2105 = vcombine.high %v2104, %v2104
  %v2107 = vunpack.c.l.s4 1966171168
  %v2108 = vunpack.c.0.s8 %v2107
  %v2109 = vlaneseq
  %v2110 = vshrl.u32 %v2109, 7
  %v2111 = vsub.s32 %v2108, %v2110
  %v2112 = vrot.slane %v2104, %v2111
  %v2114 = vunpack.c.l.s4 1966171168
  %v2115 = vunpack.c.0.s8 %v2114
  %v2116 = vlaneseq
  %v2117 = vshrl.u32 %v2116, 7
  %v2118 = vsub.s32 %v2115, %v2117
  %v2119 = vrot.slane %v2105, %v2118
  %v2122 = vunpack.c.l.s4 1966171168
  %v2123 = vunpack.c.0.s8 %v2122
  %v2124 = vlaneseq
  %v2125 = vshrl.u32 %v2124, 7
  %v2126 = vsub.s32 %v2123, %v2125
  %v2127 = vrot.slane %v1963, %v2126
  %v2128 = vcombine.high %v2127, %v2127
  %v2130 = vunpack.c.l.s4 1966171168
  %v2131 = vunpack.c.0.s8 %v2130
  %v2132 = vlaneseq
  %v2133 = vshrl.u32 %v2132, 7
  %v2134 = vsub.s32 %v2131, %v2133
  %v2135 = vrot.slane %v2127, %v2134
  %v2137 = vunpack.c.l.s4 1966171168
  %v2138 = vunpack.c.0.s8 %v2137
  %v2139 = vlaneseq
  %v2140 = vshrl.u32 %v2139, 7
  %v2141 = vsub.s32 %v2138, %v2140
  %v2142 = vrot.slane %v2128, %v2141
  %v2143 = vlaneseq
  %v2144 = vshrl.u32 %v2143, 7
  %v2145 = vsub.s32 0, %v2144
  %v2146 = vrot.slane %v2002, %v2145
  %v2147 = vlaneseq
  %v2148 = vshrl.u32 %v2147, 7
  %v2149 = vsub.s32 0, %v2148
  %v2150 = vrot.slane %v2009, %v2149
  %v2153 = vlaneseq
  %v2154 = vshrl.u32 %v2153, 7
  %v2155 = vsub.s32 0, %v2154
  %v2156 = vrot.slane %v2024, %v2155
  %v2157 = vlaneseq
  %v2158 = vshrl.u32 %v2157, 7
  %v2159 = vsub.s32 0, %v2158
  %v2160 = vrot.slane %v2031, %v2159
  %v2163 = vlaneseq
  %v2164 = vshrl.u32 %v2163, 7
  %v2165 = vsub.s32 0, %v2164
  %v2166 = vrot.slane %v2046, %v2165
  %v2167 = vlaneseq
  %v2168 = vshrl.u32 %v2167, 7
  %v2169 = vsub.s32 0, %v2168
  %v2170 = vrot.slane %v2053, %v2169
  %v2173 = vlaneseq
  %v2174 = vshrl.u32 %v2173, 7
  %v2175 = vsub.s32 0, %v2174
  %v2176 = vrot.slane %v2068, %v2175
  %v2177 = vlaneseq
  %v2178 = vshrl.u32 %v2177, 7
  %v2179 = vsub.s32 0, %v2178
  %v2180 = vrot.slane %v2075, %v2179
  %v2183 = vlaneseq
  %v2184 = vshrl.u32 %v2183, 7
  %v2185 = vsub.s32 0, %v2184
  %v2186 = vrot.slane %v2090, %v2185
  %v2187 = vlaneseq
  %v2188 = vshrl.u32 %v2187, 7
  %v2189 = vsub.s32 0, %v2188
  %v2190 = vrot.slane %v2097, %v2189
  %v2193 = vlaneseq
  %v2194 = vshrl.u32 %v2193, 7
  %v2195 = vsub.s32 0, %v2194
  %v2196 = vrot.slane %v2112, %v2195
  %v2197 = vlaneseq
  %v2198 = vshrl.u32 %v2197, 7
  %v2199 = vsub.s32 0, %v2198
  %v2200 = vrot.slane %v2119, %v2199
  %v2203 = vlaneseq
  %v2204 = vshrl.u32 %v2203, 7
  %v2205 = vsub.s32 0, %v2204
  %v2206 = vrot.slane %v2135, %v2205
  %v2207 = vlaneseq
  %v2208 = vshrl.u32 %v2207, 7
  %v2209 = vsub.s32 0, %v2208
  %v2210 = vrot.slane %v2142, %v2209
  %vm2213 = vcmask 1040384
  %v2214 = vsel %vm2213, %v1978, %v2146
  %v2215 = vsel %vm2213, %v1985, %v2150
  %vm2216 = vcmask 1041408
  %v2217 = vsel %vm2216, %v2214, %v2156
  %v2218 = vsel %vm2216, %v2215, %v2160
  %vm2219 = vcmask 1042432
  %v2220 = vsel %vm2219, %v2217, %v2166
  %v2221 = vsel %vm2219, %v2218, %v2170
  %vm2222 = vcmask 1043456
  %v2223 = vsel %vm2222, %v2220, %v2176
  %v2224 = vsel %vm2222, %v2221, %v2180
  %vm2225 = vcmask 1044480
  %v2226 = vsel %vm2225, %v2223, %v2186
  %v2227 = vsel %vm2225, %v2224, %v2190
  %vm2228 = vcmask 1045504
  %v2229 = vsel %vm2228, %v2226, %v2196
  %v2230 = vsel %vm2228, %v2227, %v2200
  %vm2231 = vcmask 1046528
  %v2232 = vsel %vm2231, %v2229, %v2206
  %v2233 = vsel %vm2231, %v2230, %v2210
  %vm2234 = vcmp.gt.f32.partialorder %v2232, 0.0
  %vm2235 = vcmp.gt.f32.partialorder %v2233, 0.0
  %v2236 = vmul.f32 %v2232, 1.442695
  %v2237 = vpow.pop %v2236
  %v2238 = vmul.f32 %v2233, 1.442695
  %v2239 = vpow.pop %v2238
  %v2240 = vsub.f32 %v2237, 1.0
  %v2241 = vsub.f32 %v2239, 1.0
  %v2242 = vmul.f32 %v2240, 1.6732632
  %v2243 = vmul.f32 %v2241, 1.6732632
  %v2244 = vsel %vm2234, %v2232, %v2242
  %v2245 = vsel %vm2235, %v2233, %v2243
  %v2246 = vmul.f32 %v2244, 1.050701
  %v2247 = vmul.f32 %v2245, 1.050701
  %v2248 = vlaneseq
  %v2249 = vshrl.u32 %v2248, 7
  %v2250 = vsub.s32 0, %v2249
  %v2251 = vrot.slane %v27, %v2250
  %v2253 = vsel %vm118, %v2246, 0
  %v2256 = vsel %vm118, %v2247, 0
  %2258 = vmatprep.subr.mxu0 0.0
  %2259 = vmatpush1.msra.mxu0 %v26
  %2260 = vmatprep.subr.mxu0 0.0
  %2261 = vmatpush1.msra.mxu0 0.0
  %2262 = vmatprep.subr.mxu0 0.0
  %2263 = vmatpush1.msra.mxu0 0.0
  %2264 = vmatprep.subr.mxu0 0.0
  %2265 = vmatpush1.msra.mxu0 0.0
  %2266 = vmatprep.subr.mxu0 0.0
  %2267 = vmatpush1.msra.mxu0 0.0
  %2268 = vmatprep.subr.mxu0 0.0
  %2269 = vmatpush1.msra.mxu0 0.0
  %2270 = vmatprep.subr.mxu0 0.0
  %2271 = vmatpush1.msra.mxu0 0.0
  %2272 = vmatprep.subr.mxu0 0.0
  %2273 = vmatpush1.msra.mxu0 0.0
  %2274 = vmatprep.subr.mxu0 0.0
  %2275 = vmatpush1.msra.mxu0 0.0
  %2276 = vmatprep.subr.mxu0 0.0
  %2277 = vmatpush1.msra.mxu0 0.0
  %2278 = vmatprep.subr.mxu0 0.0
  %2279 = vmatpush1.msra.mxu0 0.0
  %2280 = vmatprep.subr.mxu0 0.0
  %2281 = vmatpush1.msra.mxu0 0.0
  %2282 = vmatprep.subr.mxu0 0.0
  %2283 = vmatpush1.msra.mxu0 0.0
  %2284 = vmatprep.subr.mxu0 0.0
  %2285 = vmatpush1.msra.mxu0 0.0
  %2286 = vmatprep.subr.mxu0 0.0
  %2287 = vmatpush1.msra.mxu0 0.0
  %2288 = vmatprep.subr.mxu0 0.0
  %2289 = vmatpush1.msra.mxu0 0.0
  %2290 = vmatprep.subr.mxu0 0.0
  %2291 = vmatpush1.msra.mxu0 0.0
  %2292 = vmatprep.subr.mxu0 0.0
  %2293 = vmatpush1.msra.mxu0 0.0
  %2294 = vmatprep.subr.mxu0 0.0
  %2295 = vmatpush1.msra.mxu0 0.0
  %2296 = vmatprep.subr.mxu0 0.0
  %2297 = vmatpush1.msra.mxu0 0.0
  %2298 = vmatprep.subr.mxu0 0.0
  %2299 = vmatpush1.msra.mxu0 0.0
  %2300 = vmatprep.subr.mxu0 0.0
  %2301 = vmatpush1.msra.mxu0 0.0
  %2302 = vmatprep.subr.mxu0 0.0
  %2303 = vmatpush1.msra.mxu0 0.0
  %2304 = vmatprep.subr.mxu0 0.0
  %2305 = vmatpush1.msra.mxu0 0.0
  %2306 = vmatprep.subr.mxu0 0.0
  %2307 = vmatpush1.msra.mxu0 0.0
  %2308 = vmatprep.subr.mxu0 0.0
  %2309 = vmatpush1.msra.mxu0 0.0
  %2310 = vmatprep.subr.mxu0 0.0
  %2311 = vmatpush1.msra.mxu0 0.0
  %2312 = vmatprep.subr.mxu0 0.0
  %2313 = vmatpush1.msra.mxu0 0.0
  %2314 = vmatprep.subr.mxu0 0.0
  %2315 = vmatpush1.msra.mxu0 0.0
  %2316 = vmatprep.subr.mxu0 0.0
  %2317 = vmatpush1.msra.mxu0 0.0
  %2318 = vmatprep.subr.mxu0 0.0
  %2319 = vmatpush1.msra.mxu0 0.0
  %2320 = vmatprep.subr.mxu0 0.0
  %2321 = vmatpush1.msra.mxu0 0.0
  %2322 = vmatprep.mubr.f32.mxu0 0.0
  %2323 = vmatmul.mubr.f32.gmra.mrb[0].mxu0 %v2253
  %v2324 = vpop.f32.mrb[0].mxu0
  %v2325 = vadd.f32 %v2251, %v2324
  %v2326 = vpop.f32.mrb[0].mxu0
  %2327 = vmatprep.mubr.f32.mxu0 0.0
  %2328 = vmatmul.mubr.f32.gmra.mrb[0].mxu0 %v2256
  %v2329 = vpop.f32.mrb[0].mxu0
  %v2330 = vadd.f32 %v2251, %v2329
  %v2331 = vpop.f32.mrb[0].mxu0
  %2332 = vdwg.mxu0
  %vm2333 = vcmask 48128
  %2334 = vst.msk [vmem:[%s4] sm:$0xff] %vm2333, %v2325
  %2335 = vst.msk [vmem:[%s4 + $0x8] sm:$0xff] %vm2333, %v2330
  // Predicated region
  $region18: #{causal_simple_rnn_forward.1} parent=0 // pred_check
    _
  $region19: #{causal_simple_rnn_forward.1} parent=0 // pred_check_branch
    %2337 = sbr.rel (0) target = $region21
  $region20: #{causal_simple_rnn_forward.1} parent=0 // pred_region
    _
  $region21: #{causal_simple_rnn_forward.1} parent=0 // pred_fallthru
    _
  // Predicated region
  $region22: #{causal_simple_rnn_forward.1} parent=0 // pred_check
    _
  $region23: #{causal_simple_rnn_forward.1} parent=0 // pred_check_branch
    %2339 = sbr.rel (0) target = $region25
  $region24: #{causal_simple_rnn_forward.1} parent=0 // pred_region
    _
  $region25: #{causal_simple_rnn_forward.1} parent=0 // pred_fallthru
    _

</llo_original>
